<compile_context>
chip_gen: v7x
topology: tpu7x:2x2x1
jax: 0.10.0
libtpu: 0.0.40
codegen_flags: <defaults>
</compile_context>

<pallas_src>
import jax
import jax.numpy as jnp
from jax.experimental import pallas as pl
from jax.experimental.pallas import tpu as pltpu


def input_block_forward(x_nchw, params):
    """x_nchw: (N, Cin, H, W) float32.  Returns (N, Cout, H, W) float32."""
    w1, b1, g1, be1, w2, b2, g2, be2 = params
    del b1, b2  # conv biases are exactly cancelled by training-mode BN mean subtraction

    N, Cin, H, W = x_nchw.shape
    Cout = w1.shape[-1]
    Hp, Wp = H + 2, W + 2
    P = N * Hp * Wp                               # flattened padded-spatial length
    Ppad = ((P + 127) // 128) * 128               # lane-dense width of all activations
    MARG = 128                                    # lane-tile-aligned margin for shifted windows
    WIDE = MARG + Ppad + MARG
    eps = 1e-5
    inv_cnt = 1.0 / float(N * H * W)

    # ---- glue: NCHW -> (Cin, WIDE) lane-dense, halo-padded, zero margins/tail ----
    xc = jnp.transpose(x_nchw, (1, 0, 2, 3)).astype(jnp.float32)          # (Cin,N,H,W)
    xp = jnp.pad(xc, ((0, 0), (0, 0), (1, 1), (1, 1)))                    # (Cin,N,Hp,Wp)
    xw = jnp.pad(xp.reshape(Cin, P), ((0, 0), (MARG, WIDE - MARG - P)))   # (Cin, WIDE)

    # interior mask (1.0 at real output pixels, 0.0 at halo / lane-padding tail)
    ym = ((jnp.arange(Hp) >= 1) & (jnp.arange(Hp) <= H)).astype(jnp.float32)
    xm = ((jnp.arange(Wp) >= 1) & (jnp.arange(Wp) <= W)).astype(jnp.float32)
    m2 = jnp.tile((ym[:, None] * xm[None, :]).reshape(-1), (N,))          # (P,)
    mask_in = jnp.pad(m2, (0, Ppad - P)).reshape(1, Ppad)

    # weights HWIO -> (Cout, 9*C) matching patch row order (tap-major, channel-minor)
    w1_r = jnp.transpose(w1, (3, 0, 1, 2)).reshape(Cout, 9 * Cin).astype(jnp.float32)
    w2_r = jnp.transpose(w2, (3, 0, 1, 2)).reshape(Cout, 9 * Cout).astype(jnp.float32)
    col = lambda v: v.reshape(Cout, 1).astype(jnp.float32)

    # static lane offsets of the 9 conv taps inside the wide buffer
    offs = tuple(MARG + (dy - 1) * Wp + (dx - 1) for dy in range(3) for dx in range(3))

    def kernel(xw_ref, mask_ref, w1_ref, g1_ref, be1_ref,
               w2_ref, g2_ref, be2_ref, out_ref, hwide_ref):
        mask = mask_ref[...]                                              # (1, Ppad)

        # ---- conv1: 9 lane-shifted windows -> one im2col matmul on the MXU ----
        patches1 = jnp.concatenate([xw_ref[:, o:o + Ppad] for o in offs], axis=0)
        acc1 = jnp.dot(w1_ref[...], patches1, preferred_element_type=jnp.float32)

        # ---- BN1 (training-mode batch stats, one pass) folded to scale/shift + ReLU ----
        masked1 = acc1 * mask
        mean1 = jnp.sum(masked1, axis=1, keepdims=True) * inv_cnt
        var1 = jnp.sum(masked1 * acc1, axis=1, keepdims=True) * inv_cnt - mean1 * mean1
        scale1 = g1_ref[...] * jax.lax.rsqrt(var1 + eps)
        shift1 = be1_ref[...] - mean1 * scale1
        h = jnp.maximum(acc1 * scale1 + shift1, 0.0) * mask   # zeroed halo == conv2 padding

        # ---- stage h into wide scratch (aligned stores; only the two margins zeroed) ----
        hwide_ref[:, :MARG] = jnp.zeros((Cout, MARG), jnp.float32)
        hwide_ref[:, MARG + Ppad:] = jnp.zeros((Cout, MARG), jnp.float32)
        hwide_ref[:, MARG:MARG + Ppad] = h

        # ---- conv2 ----
        patches2 = jnp.concatenate([hwide_ref[:, o:o + Ppad] for o in offs], axis=0)
        acc2 = jnp.dot(w2_ref[...], patches2, preferred_element_type=jnp.float32)

        # ---- BN2 + ReLU, lane-dense full-width output store ----
        masked2 = acc2 * mask
        mean2 = jnp.sum(masked2, axis=1, keepdims=True) * inv_cnt
        var2 = jnp.sum(masked2 * acc2, axis=1, keepdims=True) * inv_cnt - mean2 * mean2
        scale2 = g2_ref[...] * jax.lax.rsqrt(var2 + eps)
        shift2 = be2_ref[...] - mean2 * scale2
        out_ref[...] = jnp.maximum(acc2 * scale2 + shift2, 0.0)

    def full(shape):
        return pl.BlockSpec(shape, lambda i, _n=len(shape): (0,) * _n)

    out_flat = pl.pallas_call(
        kernel,
        out_shape=jax.ShapeDtypeStruct((Cout, Ppad), jnp.float32),
        grid=(1,),
        in_specs=[
            full((Cin, WIDE)), full((1, Ppad)),
            full((Cout, 9 * Cin)), full((Cout, 1)), full((Cout, 1)),
            full((Cout, 9 * Cout)), full((Cout, 1)), full((Cout, 1)),
        ],
        out_specs=full((Cout, Ppad)),
        scratch_shapes=[pltpu.VMEM((Cout, WIDE), jnp.float32)],
        compiler_params=pltpu.CompilerParams(dimension_semantics=("arbitrary",)),
    )(xw, mask_in, w1_r, col(g1), col(be1), w2_r, col(g2), col(be2))

    # glue: (Cout, Ppad) -> interior -> NCHW
    out = out_flat[:, :P].reshape(Cout, N, Hp, Wp)[:, :, 1:1 + H, 1:1 + W]
    return jnp.transpose(out, (1, 0, 2, 3))


def reference_forward(x_nchw, params):
    """Pure-JAX reference mirroring the PyTorch module (training-mode BN, with conv biases)."""
    w1, b1, g1, be1, w2, b2, g2, be2 = params
    x = jnp.transpose(x_nchw, (0, 2, 3, 1)).astype(jnp.float32)

    def conv(x, w, b):
        y = jax.lax.conv_general_dilated(
            x, w, window_strides=(1, 1), padding="SAME",
            dimension_numbers=("NHWC", "HWIO", "NHWC"))
        return y + b

    def bn_relu(y, g, be):
        m = jnp.mean(y, axis=(0, 1, 2), keepdims=True)
        v = jnp.mean((y - m) ** 2, axis=(0, 1, 2), keepdims=True)
        return jnp.maximum((y - m) * jax.lax.rsqrt(v + 1e-5) * g + be, 0.0)

    h = bn_relu(conv(x, w1, b1), g1, be1)
    o = bn_relu(conv(h, w2, b2), g2, be2)
    return jnp.transpose(o, (0, 3, 1, 2))


if __name__ == "__main__":
    # Small shapes consistent with input_block(in_channels=4, out_channels=8)
    N, Cin, Cout, H, W = 2, 4, 8, 16, 16

    key = jax.random.PRNGKey(0)
    kx, k1, k2, k3, k4, k5, k6, k7, k8 = jax.random.split(key, 9)

    x = jax.random.normal(kx, (N, Cin, H, W), jnp.float32)          # NCHW like PyTorch

    # Deterministic synthetic parameters (HWIO conv weights).
    w1 = 0.1 * jax.random.normal(k1, (3, 3, Cin, Cout), jnp.float32)
    b1 = 0.1 * jax.random.normal(k2, (Cout,), jnp.float32)
    g1 = 1.0 + 0.1 * jax.random.normal(k3, (Cout,), jnp.float32)    # BN gamma
    be1 = 0.1 * jax.random.normal(k4, (Cout,), jnp.float32)         # BN beta
    w2 = 0.1 * jax.random.normal(k5, (3, 3, Cout, Cout), jnp.float32)
    b2 = 0.1 * jax.random.normal(k6, (Cout,), jnp.float32)
    g2 = 1.0 + 0.1 * jax.random.normal(k7, (Cout,), jnp.float32)
    be2 = 0.1 * jax.random.normal(k8, (Cout,), jnp.float32)

    params = (w1, b1, g1, be1, w2, b2, g2, be2)

    out = jax.block_until_ready(input_block_forward(x, params))
    ref = jax.block_until_ready(reference_forward(x, params))

    assert out.shape == (N, Cout, H, W), out.shape
    assert jnp.allclose(out, ref, atol=1e-4, rtol=1e-4), float(jnp.max(jnp.abs(out - ref)))
    print("KERNEL_OK")
</pallas_src>

<mosaic_0001>
module attributes {stable_mosaic.version = 11 : i64} {
  func.func @kernel(%arg0: i32, %arg1: memref<4x1024xf32, #tpu.memory_space<vmem>>, %arg2: memref<1x768xf32, #tpu.memory_space<vmem>>, %arg3: memref<8x36xf32, #tpu.memory_space<vmem>>, %arg4: memref<8x1xf32, #tpu.memory_space<vmem>>, %arg5: memref<8x1xf32, #tpu.memory_space<vmem>>, %arg6: memref<8x72xf32, #tpu.memory_space<vmem>>, %arg7: memref<8x1xf32, #tpu.memory_space<vmem>>, %arg8: memref<8x1xf32, #tpu.memory_space<vmem>>, %arg9: memref<8x768xf32, #tpu.memory_space<vmem>>, %arg10: memref<8x1024xf32, #tpu.memory_space<vmem>>) attributes {dimension_semantics = [#tpu.dimension_semantics<arbitrary>], iteration_bounds = array<i64: 1>, scalar_prefetch = 0 : i64, scratch_operands = 1 : i64, tpu.core_type = #tpu.core_type<tc>, window_params = [{pipeline_mode = #tpu.pipeline_mode<synchronous>, transform_indices = @transform_0, window_bounds = array<i64: 4, 1024>}, {pipeline_mode = #tpu.pipeline_mode<synchronous>, transform_indices = @transform_1, window_bounds = array<i64: 1, 768>}, {pipeline_mode = #tpu.pipeline_mode<synchronous>, transform_indices = @transform_2, window_bounds = array<i64: 8, 36>}, {pipeline_mode = #tpu.pipeline_mode<synchronous>, transform_indices = @transform_3, window_bounds = array<i64: 8, 1>}, {pipeline_mode = #tpu.pipeline_mode<synchronous>, transform_indices = @transform_4, window_bounds = array<i64: 8, 1>}, {pipeline_mode = #tpu.pipeline_mode<synchronous>, transform_indices = @transform_5, window_bounds = array<i64: 8, 72>}, {pipeline_mode = #tpu.pipeline_mode<synchronous>, transform_indices = @transform_6, window_bounds = array<i64: 8, 1>}, {pipeline_mode = #tpu.pipeline_mode<synchronous>, transform_indices = @transform_7, window_bounds = array<i64: 8, 1>}, {pipeline_mode = #tpu.pipeline_mode<synchronous>, transform_indices = @transform_8, window_bounds = array<i64: 8, 768>}]} {
    %c0 = arith.constant 0 : index
    %c0_0 = arith.constant 0 : index
    %0 = vector.load %arg2[%c0, %c0_0] : memref<1x768xf32, #tpu.memory_space<vmem>>, vector<1x768xf32>
    %c0_1 = arith.constant 0 : index
    %c109 = arith.constant 109 : index
    %1 = vector.load %arg1[%c0_1, %c109] : memref<4x1024xf32, #tpu.memory_space<vmem>>, vector<4x768xf32>
    %c0_2 = arith.constant 0 : index
    %c110 = arith.constant 110 : index
    %2 = vector.load %arg1[%c0_2, %c110] : memref<4x1024xf32, #tpu.memory_space<vmem>>, vector<4x768xf32>
    %c0_3 = arith.constant 0 : index
    %c111 = arith.constant 111 : index
    %3 = vector.load %arg1[%c0_3, %c111] : memref<4x1024xf32, #tpu.memory_space<vmem>>, vector<4x768xf32>
    %c0_4 = arith.constant 0 : index
    %c127 = arith.constant 127 : index
    %4 = vector.load %arg1[%c0_4, %c127] : memref<4x1024xf32, #tpu.memory_space<vmem>>, vector<4x768xf32>
    %c0_5 = arith.constant 0 : index
    %c128 = arith.constant 128 : index
    %5 = vector.load %arg1[%c0_5, %c128] : memref<4x1024xf32, #tpu.memory_space<vmem>>, vector<4x768xf32>
    %c0_6 = arith.constant 0 : index
    %c129 = arith.constant 129 : index
    %6 = vector.load %arg1[%c0_6, %c129] : memref<4x1024xf32, #tpu.memory_space<vmem>>, vector<4x768xf32>
    %c0_7 = arith.constant 0 : index
    %c145 = arith.constant 145 : index
    %7 = vector.load %arg1[%c0_7, %c145] : memref<4x1024xf32, #tpu.memory_space<vmem>>, vector<4x768xf32>
    %c0_8 = arith.constant 0 : index
    %c146 = arith.constant 146 : index
    %8 = vector.load %arg1[%c0_8, %c146] : memref<4x1024xf32, #tpu.memory_space<vmem>>, vector<4x768xf32>
    %c0_9 = arith.constant 0 : index
    %c147 = arith.constant 147 : index
    %9 = vector.load %arg1[%c0_9, %c147] : memref<4x1024xf32, #tpu.memory_space<vmem>>, vector<4x768xf32>
    %10 = tpu.concatenate %1, %2, %3, %4, %5, %6, %7, %8, %9 in 0 : vector<4x768xf32>, vector<4x768xf32>, vector<4x768xf32>, vector<4x768xf32>, vector<4x768xf32>, vector<4x768xf32>, vector<4x768xf32>, vector<4x768xf32>, vector<4x768xf32> -> vector<36x768xf32>
    %c0_10 = arith.constant 0 : index
    %c0_11 = arith.constant 0 : index
    %11 = vector.load %arg3[%c0_10, %c0_11] : memref<8x36xf32, #tpu.memory_space<vmem>>, vector<8x36xf32>
    %cst = arith.constant dense<0.000000e+00> : vector<8x768xf32>
    %12 = tpu.matmul %11, %10, %cst {dimension_numbers = #tpu.dot_dimension_numbers<[1], [0], [0], [1], [0, 0, 1, 1], [], []>} : vector<8x36xf32>, vector<36x768xf32>, vector<8x768xf32> -> vector<8x768xf32>
    %13 = vector.broadcast %0 : vector<1x768xf32> to vector<8x768xf32>
    %14 = arith.mulf %12, %13 : vector<8x768xf32>
    %cst_12 = arith.constant dense<0.000000e+00> : vector<8xf32>
    %15 = vector.multi_reduction <add>, %14, %cst_12 [1] : vector<8x768xf32> to vector<8xf32>
    %16 = vector.shape_cast %15 : vector<8xf32> to vector<8x1xf32>
    %cst_13 = arith.constant 0.001953125 : f32
    %17 = vector.broadcast %cst_13 : f32 to vector<8x1xf32>
    %18 = arith.mulf %16, %17 : vector<8x1xf32>
    %19 = arith.mulf %14, %12 : vector<8x768xf32>
    %cst_14 = arith.constant dense<0.000000e+00> : vector<8xf32>
    %20 = vector.multi_reduction <add>, %19, %cst_14 [1] : vector<8x768xf32> to vector<8xf32>
    %21 = vector.shape_cast %20 : vector<8xf32> to vector<8x1xf32>
    %cst_15 = arith.constant 0.001953125 : f32
    %22 = vector.broadcast %cst_15 : f32 to vector<8x1xf32>
    %23 = arith.mulf %21, %22 : vector<8x1xf32>
    %24 = arith.mulf %18, %18 : vector<8x1xf32>
    %25 = arith.subf %23, %24 : vector<8x1xf32>
    %c0_16 = arith.constant 0 : index
    %c0_17 = arith.constant 0 : index
    %26 = vector.load %arg4[%c0_16, %c0_17] : memref<8x1xf32, #tpu.memory_space<vmem>>, vector<8x1xf32>
    %cst_18 = arith.constant 9.99999974E-6 : f32
    %27 = vector.broadcast %cst_18 : f32 to vector<8x1xf32>
    %28 = arith.addf %25, %27 : vector<8x1xf32>
    %29 = math.rsqrt %28 : vector<8x1xf32>
    %30 = arith.mulf %26, %29 : vector<8x1xf32>
    %c0_19 = arith.constant 0 : index
    %c0_20 = arith.constant 0 : index
    %31 = vector.load %arg5[%c0_19, %c0_20] : memref<8x1xf32, #tpu.memory_space<vmem>>, vector<8x1xf32>
    %32 = arith.mulf %18, %30 : vector<8x1xf32>
    %33 = arith.subf %31, %32 : vector<8x1xf32>
    %34 = vector.broadcast %30 : vector<8x1xf32> to vector<8x768xf32>
    %35 = arith.mulf %12, %34 : vector<8x768xf32>
    %36 = vector.broadcast %33 : vector<8x1xf32> to vector<8x768xf32>
    %37 = arith.addf %35, %36 : vector<8x768xf32>
    %cst_21 = arith.constant 0.000000e+00 : f32
    %38 = vector.broadcast %cst_21 : f32 to vector<8x768xf32>
    %39 = arith.maximumf %37, %38 : vector<8x768xf32>
    %40 = vector.broadcast %0 : vector<1x768xf32> to vector<8x768xf32>
    %41 = arith.mulf %39, %40 : vector<8x768xf32>
    %cst_22 = arith.constant 0.000000e+00 : f32
    %42 = vector.broadcast %cst_22 : f32 to vector<8x128xf32>
    %c0_23 = arith.constant 0 : index
    %c0_24 = arith.constant 0 : index
    %43 = vector.load %arg10[%c0_23, %c0_24] : memref<8x1024xf32, #tpu.memory_space<vmem>>, vector<8x128xf32>
    tpu.vector_store %arg10[%c0_23, %c0_24], %42 {strides = array<i32>} : memref<8x1024xf32, #tpu.memory_space<vmem>>, vector<8x128xf32>,
    %cst_25 = arith.constant 0.000000e+00 : f32
    %44 = vector.broadcast %cst_25 : f32 to vector<8x128xf32>
    %c0_26 = arith.constant 0 : index
    %c896 = arith.constant 896 : index
    %45 = vector.load %arg10[%c0_26, %c896] : memref<8x1024xf32, #tpu.memory_space<vmem>>, vector<8x128xf32>
    tpu.vector_store %arg10[%c0_26, %c896], %44 {strides = array<i32>} : memref<8x1024xf32, #tpu.memory_space<vmem>>, vector<8x128xf32>,
    %c0_27 = arith.constant 0 : index
    %c128_28 = arith.constant 128 : index
    %46 = vector.load %arg10[%c0_27, %c128_28] : memref<8x1024xf32, #tpu.memory_space<vmem>>, vector<8x768xf32>
    tpu.vector_store %arg10[%c0_27, %c128_28], %41 {strides = array<i32>} : memref<8x1024xf32, #tpu.memory_space<vmem>>, vector<8x768xf32>,
    %c0_29 = arith.constant 0 : index
    %c109_30 = arith.constant 109 : index
    %47 = vector.load %arg10[%c0_29, %c109_30] : memref<8x1024xf32, #tpu.memory_space<vmem>>, vector<8x768xf32>
    %c0_31 = arith.constant 0 : index
    %c110_32 = arith.constant 110 : index
    %48 = vector.load %arg10[%c0_31, %c110_32] : memref<8x1024xf32, #tpu.memory_space<vmem>>, vector<8x768xf32>
    %c0_33 = arith.constant 0 : index
    %c111_34 = arith.constant 111 : index
    %49 = vector.load %arg10[%c0_33, %c111_34] : memref<8x1024xf32, #tpu.memory_space<vmem>>, vector<8x768xf32>
    %c0_35 = arith.constant 0 : index
    %c127_36 = arith.constant 127 : index
    %50 = vector.load %arg10[%c0_35, %c127_36] : memref<8x1024xf32, #tpu.memory_space<vmem>>, vector<8x768xf32>
    %c0_37 = arith.constant 0 : index
    %c128_38 = arith.constant 128 : index
    %51 = vector.load %arg10[%c0_37, %c128_38] : memref<8x1024xf32, #tpu.memory_space<vmem>>, vector<8x768xf32>
    %c0_39 = arith.constant 0 : index
    %c129_40 = arith.constant 129 : index
    %52 = vector.load %arg10[%c0_39, %c129_40] : memref<8x1024xf32, #tpu.memory_space<vmem>>, vector<8x768xf32>
    %c0_41 = arith.constant 0 : index
    %c145_42 = arith.constant 145 : index
    %53 = vector.load %arg10[%c0_41, %c145_42] : memref<8x1024xf32, #tpu.memory_space<vmem>>, vector<8x768xf32>
    %c0_43 = arith.constant 0 : index
    %c146_44 = arith.constant 146 : index
    %54 = vector.load %arg10[%c0_43, %c146_44] : memref<8x1024xf32, #tpu.memory_space<vmem>>, vector<8x768xf32>
    %c0_45 = arith.constant 0 : index
    %c147_46 = arith.constant 147 : index
    %55 = vector.load %arg10[%c0_45, %c147_46] : memref<8x1024xf32, #tpu.memory_space<vmem>>, vector<8x768xf32>
    %56 = tpu.concatenate %47, %48, %49, %50, %51, %52, %53, %54, %55 in 0 : vector<8x768xf32>, vector<8x768xf32>, vector<8x768xf32>, vector<8x768xf32>, vector<8x768xf32>, vector<8x768xf32>, vector<8x768xf32>, vector<8x768xf32>, vector<8x768xf32> -> vector<72x768xf32>
    %c0_47 = arith.constant 0 : index
    %c0_48 = arith.constant 0 : index
    %57 = vector.load %arg6[%c0_47, %c0_48] : memref<8x72xf32, #tpu.memory_space<vmem>>, vector<8x72xf32>
    %cst_49 = arith.constant dense<0.000000e+00> : vector<8x768xf32>
    %58 = tpu.matmul %57, %56, %cst_49 {dimension_numbers = #tpu.dot_dimension_numbers<[1], [0], [0], [1], [0, 0, 1, 1], [], []>} : vector<8x72xf32>, vector<72x768xf32>, vector<8x768xf32> -> vector<8x768xf32>
    %59 = vector.broadcast %0 : vector<1x768xf32> to vector<8x768xf32>
    %60 = arith.mulf %58, %59 : vector<8x768xf32>
    %cst_50 = arith.constant dense<0.000000e+00> : vector<8xf32>
    %61 = vector.multi_reduction <add>, %60, %cst_50 [1] : vector<8x768xf32> to vector<8xf32>
    %62 = vector.shape_cast %61 : vector<8xf32> to vector<8x1xf32>
    %cst_51 = arith.constant 0.001953125 : f32
    %63 = vector.broadcast %cst_51 : f32 to vector<8x1xf32>
    %64 = arith.mulf %62, %63 : vector<8x1xf32>
    %65 = arith.mulf %60, %58 : vector<8x768xf32>
    %cst_52 = arith.constant dense<0.000000e+00> : vector<8xf32>
    %66 = vector.multi_reduction <add>, %65, %cst_52 [1] : vector<8x768xf32> to vector<8xf32>
    %67 = vector.shape_cast %66 : vector<8xf32> to vector<8x1xf32>
    %cst_53 = arith.constant 0.001953125 : f32
    %68 = vector.broadcast %cst_53 : f32 to vector<8x1xf32>
    %69 = arith.mulf %67, %68 : vector<8x1xf32>
    %70 = arith.mulf %64, %64 : vector<8x1xf32>
    %71 = arith.subf %69, %70 : vector<8x1xf32>
    %c0_54 = arith.constant 0 : index
    %c0_55 = arith.constant 0 : index
    %72 = vector.load %arg7[%c0_54, %c0_55] : memref<8x1xf32, #tpu.memory_space<vmem>>, vector<8x1xf32>
    %cst_56 = arith.constant 9.99999974E-6 : f32
    %73 = vector.broadcast %cst_56 : f32 to vector<8x1xf32>
    %74 = arith.addf %71, %73 : vector<8x1xf32>
    %75 = math.rsqrt %74 : vector<8x1xf32>
    %76 = arith.mulf %72, %75 : vector<8x1xf32>
    %c0_57 = arith.constant 0 : index
    %c0_58 = arith.constant 0 : index
    %77 = vector.load %arg8[%c0_57, %c0_58] : memref<8x1xf32, #tpu.memory_space<vmem>>, vector<8x1xf32>
    %78 = arith.mulf %64, %76 : vector<8x1xf32>
    %79 = arith.subf %77, %78 : vector<8x1xf32>
    %80 = vector.broadcast %76 : vector<8x1xf32> to vector<8x768xf32>
    %81 = arith.mulf %58, %80 : vector<8x768xf32>
    %82 = vector.broadcast %79 : vector<8x1xf32> to vector<8x768xf32>
    %83 = arith.addf %81, %82 : vector<8x768xf32>
    %cst_59 = arith.constant 0.000000e+00 : f32
    %84 = vector.broadcast %cst_59 : f32 to vector<8x768xf32>
    %85 = arith.maximumf %83, %84 : vector<8x768xf32>
    %c0_60 = arith.constant 0 : index
    %c0_61 = arith.constant 0 : index
    %86 = vector.load %arg9[%c0_60, %c0_61] : memref<8x768xf32, #tpu.memory_space<vmem>>, vector<8x768xf32>
    tpu.vector_store %arg9[%c0_60, %c0_61], %85 {strides = array<i32>} : memref<8x768xf32, #tpu.memory_space<vmem>>, vector<8x768xf32>,
    return
  }
  func.func @transform_0(%arg0: i32) -> (i32, i32) {
    %c0_i32 = arith.constant 0 : i32
    %c0_i32_0 = arith.constant 0 : i32
    %c0_i32_1 = arith.constant 0 : i32
    return %c0_i32, %c0_i32_0 : i32, i32
  }
  func.func @transform_1(%arg0: i32) -> (i32, i32) {
    %c0_i32 = arith.constant 0 : i32
    %c0_i32_0 = arith.constant 0 : i32
    %c0_i32_1 = arith.constant 0 : i32
    return %c0_i32, %c0_i32_0 : i32, i32
  }
  func.func @transform_2(%arg0: i32) -> (i32, i32) {
    %c0_i32 = arith.constant 0 : i32
    %c0_i32_0 = arith.constant 0 : i32
    %c0_i32_1 = arith.constant 0 : i32
    return %c0_i32, %c0_i32_0 : i32, i32
  }
  func.func @transform_3(%arg0: i32) -> (i32, i32) {
    %c0_i32 = arith.constant 0 : i32
    %c0_i32_0 = arith.constant 0 : i32
    %c0_i32_1 = arith.constant 0 : i32
    return %c0_i32, %c0_i32_0 : i32, i32
  }
  func.func @transform_4(%arg0: i32) -> (i32, i32) {
    %c0_i32 = arith.constant 0 : i32
    %c0_i32_0 = arith.constant 0 : i32
    %c0_i32_1 = arith.constant 0 : i32
    return %c0_i32, %c0_i32_0 : i32, i32
  }
  func.func @transform_5(%arg0: i32) -> (i32, i32) {
    %c0_i32 = arith.constant 0 : i32
    %c0_i32_0 = arith.constant 0 : i32
    %c0_i32_1 = arith.constant 0 : i32
    return %c0_i32, %c0_i32_0 : i32, i32
  }
  func.func @transform_6(%arg0: i32) -> (i32, i32) {
    %c0_i32 = arith.constant 0 : i32
    %c0_i32_0 = arith.constant 0 : i32
    %c0_i32_1 = arith.constant 0 : i32
    return %c0_i32, %c0_i32_0 : i32, i32
  }
  func.func @transform_7(%arg0: i32) -> (i32, i32) {
    %c0_i32 = arith.constant 0 : i32
    %c0_i32_0 = arith.constant 0 : i32
    %c0_i32_1 = arith.constant 0 : i32
    return %c0_i32, %c0_i32_0 : i32, i32
  }
  func.func @transform_8(%arg0: i32) -> (i32, i32) {
    %c0_i32 = arith.constant 0 : i32
    %c0_i32_0 = arith.constant 0 : i32
    %c0_i32_1 = arith.constant 0 : i32
    return %c0_i32, %c0_i32_0 : i32, i32
  }
}

</mosaic_0001>

<llo_original>
// kernel: tpu_custom_call.1
$region0: #{tpu_custom_call.1}
  #allocation0 [shape = 'u32[]', space=smem, size = 0x4, offset = 0x4, fixed_abs, tag = 'smem constant byte address 0x4 - core index']
  #allocation1 [shape = 'u32[144,128]{1,0:T(1,128)}', space=vmem, size = 0x12000, scoped, tag = 'internal scratch']
  #allocation2 [shape = 'f32[8,1024]{1,0:T(8,128)}', space=vmem, size = 0x8000, scoped, tag = 'scratch operand']
  %s0 = inlined_call_operand.vmem [shape: f32[4,1024], index: 0, kind: input, shape index: {}]
  %s1 = inlined_call_operand.hbm [shape: f32[1,768], index: 1, kind: input, shape index: {}]
  %s2 = inlined_call_operand.vmem [shape: f32[8,36], index: 2, kind: input, shape index: {}]
  %s3 = inlined_call_operand.vmem [shape: f32[8,1], index: 3, kind: input, shape index: {}]
  %s4 = inlined_call_operand.vmem [shape: f32[8,1], index: 4, kind: input, shape index: {}]
  %s5 = inlined_call_operand.vmem [shape: f32[8,72], index: 5, kind: input, shape index: {}]
  %s6 = inlined_call_operand.vmem [shape: f32[8,1], index: 6, kind: input, shape index: {}]
  %s7 = inlined_call_operand.vmem [shape: f32[8,1], index: 7, kind: input, shape index: {}]
  %s8 = inlined_call_operand.hbm [shape: f32[8,768], index: 8, kind: output, shape index: {}]
  %s9 = sld [smem:[#allocation0]]
  $region46: #{tpu_custom_call.1} parent=0
    _
  %s11 = ssub.s32 1, %s9
  %s12 = scalar_select 0, %s11, %s9
  $region1: #{tpu_custom_call.1} parent=0
    #allocation3 [shape = 'u8[3072]{0}', space=vmem, size = 0xc00, scoped, tag = 'input window, operand 1, single buffered']
    #allocation4 [shape = 's32[1]{0}', space=sflag, size = 0x4, scoped, tag = 'scoped memory for tpu_custom_call.1']
    #allocation5 [shape = 's32[1]{0}', space=sflag, size = 0x4, scoped, tag = 'scoped memory for tpu_custom_call.1']
    #allocation6 [shape = 'u8[24576]{0}', space=vmem, size = 0x6000, scoped, tag = 'output window, operand 0, single buffered']
    %13 = vsyncpa [#allocation4], 0
    %14 = vsyncpa [#allocation5], 0
    // Predicated region
    $region2: #{tpu_custom_call.1} parent=1 // pred_check
      _
    $region3: #{tpu_custom_call.1} parent=1 // pred_check_branch
      %16 = sbr.rel (0) target = $region5
    $region4: #{tpu_custom_call.1} parent=1 // pred_region
      _
    $region5: #{tpu_custom_call.1} parent=1 // pred_fallthru
      _
    // Predicated region
    $region6: #{tpu_custom_call.1} parent=1 // pred_check
      _
    $region7: #{tpu_custom_call.1} parent=1 // pred_check_branch
      %18 = sbr.rel (0) target = $region9
    $region8: #{tpu_custom_call.1} parent=1 // pred_region
      %s20 = ssub.s32 96, 96
      %21 = vsyncadd [#allocation4], %s20
      %s23 = sshll.u32 [#allocation3], 4
      %s24 = int_to_ptr.vmem [resolvable:$true] %s23
      %26 = dma.hbm_to_vmem [thread:$0]  %s1, 96, %s24, [#allocation4]
    $region9: #{tpu_custom_call.1} parent=1 // pred_fallthru
      _
    // Predicated region
    $region10: #{tpu_custom_call.1} parent=1 // pred_check
      _
    $region11: #{tpu_custom_call.1} parent=1 // pred_check_branch
      %28 = sbr.rel (0) target = $region13
    $region12: #{tpu_custom_call.1} parent=1 // pred_region
      _
    $region13: #{tpu_custom_call.1} parent=1 // pred_fallthru
      _
    // Predicated region
    $region14: #{tpu_custom_call.1} parent=1 // pred_check
      _
    $region15: #{tpu_custom_call.1} parent=1 // pred_check_branch
      %30 = sbr.rel (0) target = $region17
    $region16: #{tpu_custom_call.1} parent=1 // pred_region
      _
    $region17: #{tpu_custom_call.1} parent=1 // pred_fallthru
      _
    // Predicated region
    $region18: #{tpu_custom_call.1} parent=1 // pred_check
      _
    $region19: #{tpu_custom_call.1} parent=1 // pred_check_branch
      %32 = sbr.rel (0) target = $region21
    $region20: #{tpu_custom_call.1} parent=1 // pred_region
      _
    $region21: #{tpu_custom_call.1} parent=1 // pred_fallthru
      _
    // Predicated region
    $region22: #{tpu_custom_call.1} parent=1 // pred_check
      _
    $region23: #{tpu_custom_call.1} parent=1 // pred_check_branch
      %34 = sbr.rel (0) target = $region25
    $region24: #{tpu_custom_call.1} parent=1 // pred_region
      _
    $region25: #{tpu_custom_call.1} parent=1 // pred_fallthru
      _
    // Predicated region
    $region26: #{tpu_custom_call.1} parent=1 // pred_check
      _
    $region27: #{tpu_custom_call.1} parent=1 // pred_check_branch
      %36 = sbr.rel (0) target = $region29
    $region28: #{tpu_custom_call.1} parent=1 // pred_region
      _
    $region29: #{tpu_custom_call.1} parent=1 // pred_fallthru
      _
    // Predicated region
    $region30: #{tpu_custom_call.1} parent=1 // pred_check
      _
    $region31: #{tpu_custom_call.1} parent=1 // pred_check_branch
      %38 = sbr.rel (0) target = $region33
    $region32: #{tpu_custom_call.1} parent=1 // pred_region
      _
    $region33: #{tpu_custom_call.1} parent=1 // pred_fallthru
      _
    // Predicated region
    $region34: #{tpu_custom_call.1} parent=1 // pred_check
      _
    $region35: #{tpu_custom_call.1} parent=1 // pred_check_branch
      %40 = sbr.rel (0) target = $region37
    $region36: #{tpu_custom_call.1} parent=1 // pred_region
      %41 = dma.done [#allocation4], 96
    $region37: #{tpu_custom_call.1} parent=1 // pred_fallthru
      _
    %v42 = vld [vmem:[#allocation3] sm:$0x3f]
    %v43 = vld [vmem:[%s0] sm:$0xff]
    %v44 = vld [vmem:[%s0 + $0x8] sm:$0xff]
    %v45 = vld [vmem:[%s0 + $0x10] sm:$0xff]
    %v46 = vld [vmem:[%s0 + $0x18] sm:$0xf]
    %v47 = vld [vmem:[%s0 + $0x4] sm:$0xff]
    %v48 = vld [vmem:[%s0 + $0xc] sm:$0xff]
    %v49 = vld [vmem:[%s0 + $0x14] sm:$0xff]
    %v50 = vld [vmem:[%s0 + $0x4] sm:$0xff]
    %v51 = vld [vmem:[%s0 + $0xc] sm:$0xff]
    %v52 = vld [vmem:[%s0 + $0x14] sm:$0xff]
    %v53 = vld [vmem:[%s0 + $0x1c] sm:$0xf]
    %v58 = vcombine.high %v43, %v43
    %v59 = vcombine.high %v44, %v44
    %v60 = vcombine.high %v45, %v45
    %v64 = vcombine.low %v43, %v43
    %v65 = vcombine.low %v44, %v44
    %v66 = vcombine.low %v45, %v45
    %v67 = vcombine.low %v46, %v46
    %68 = vrot.lane.b32.xlu0 %v64, 127
    %v69 = vpop.permute.xlu0 %68
    %70 = vrot.lane.b32.xlu0 %v43, 127
    %v71 = vpop.permute.xlu0 %70
    %72 = vrot.lane.b32.xlu0 %v65, 127
    %v73 = vpop.permute.xlu0 %72
    %74 = vrot.lane.b32.xlu0 %v44, 127
    %v75 = vpop.permute.xlu0 %74
    %76 = vrot.lane.b32.xlu0 %v66, 127
    %v77 = vpop.permute.xlu0 %76
    %78 = vrot.lane.b32.xlu0 %v45, 127
    %v79 = vpop.permute.xlu0 %78
    %80 = vrot.lane.b32.xlu0 %v67, 127
    %v81 = vpop.permute.xlu0 %80
    %vm82 = vcmask 1039360
    %v83 = vsel %vm82, %v69, %v71
    %v84 = vsel %vm82, %v71, %v73
    %v85 = vsel %vm82, %v73, %v75
    %v86 = vsel %vm82, %v75, %v77
    %v87 = vsel %vm82, %v77, %v79
    %v88 = vsel %vm82, %v79, %v81
    %96 = vrot.lane.b32.xlu0 %v43, 126
    %v97 = vpop.permute.xlu0 %96
    %98 = vrot.lane.b32.xlu0 %v58, 126
    %v99 = vpop.permute.xlu0 %98
    %100 = vrot.lane.b32.xlu0 %v44, 126
    %v101 = vpop.permute.xlu0 %100
    %102 = vrot.lane.b32.xlu0 %v59, 126
    %v103 = vpop.permute.xlu0 %102
    %104 = vrot.lane.b32.xlu0 %v45, 126
    %v105 = vpop.permute.xlu0 %104
    %106 = vrot.lane.b32.xlu0 %v60, 126
    %v107 = vpop.permute.xlu0 %106
    %108 = vrot.lane.b32.xlu0 %v46, 126
    %v109 = vpop.permute.xlu0 %108
    %vm110 = vcmask 1031168
    %v111 = vsel %vm110, %v97, %v99
    %v112 = vsel %vm110, %v99, %v101
    %v113 = vsel %vm110, %v101, %v103
    %v114 = vsel %vm110, %v103, %v105
    %v115 = vsel %vm110, %v105, %v107
    %v116 = vsel %vm110, %v107, %v109
    %124 = vrot.lane.b32.xlu0 %v64, 110
    %v125 = vpop.permute.xlu0 %124
    %126 = vrot.lane.b32.xlu0 %v43, 110
    %v127 = vpop.permute.xlu0 %126
    %128 = vrot.lane.b32.xlu0 %v65, 110
    %v129 = vpop.permute.xlu0 %128
    %130 = vrot.lane.b32.xlu0 %v44, 110
    %v131 = vpop.permute.xlu0 %130
    %132 = vrot.lane.b32.xlu0 %v66, 110
    %v133 = vpop.permute.xlu0 %132
    %134 = vrot.lane.b32.xlu0 %v45, 110
    %v135 = vpop.permute.xlu0 %134
    %136 = vrot.lane.b32.xlu0 %v67, 110
    %v137 = vpop.permute.xlu0 %136
    %vm138 = vcmask 900096
    %v139 = vsel %vm138, %v125, %v127
    %v140 = vsel %vm138, %v127, %v129
    %v141 = vsel %vm138, %v129, %v131
    %v142 = vsel %vm138, %v131, %v133
    %v143 = vsel %vm138, %v133, %v135
    %v144 = vsel %vm138, %v135, %v137
    %v155 = vcombine.high %v47, %v47
    %v156 = vcombine.high %v48, %v48
    %v157 = vcombine.high %v49, %v49
    %158 = vrot.lane.b32.xlu0 %v47, 109
    %v159 = vpop.permute.xlu0 %158
    %160 = vrot.lane.b32.xlu0 %v155, 109
    %v161 = vpop.permute.xlu0 %160
    %162 = vrot.lane.b32.xlu0 %v48, 109
    %v163 = vpop.permute.xlu0 %162
    %164 = vrot.lane.b32.xlu0 %v156, 109
    %v165 = vpop.permute.xlu0 %164
    %166 = vrot.lane.b32.xlu0 %v49, 109
    %v167 = vpop.permute.xlu0 %166
    %168 = vrot.lane.b32.xlu0 %v157, 109
    %v169 = vpop.permute.xlu0 %168
    %vm170 = vcmask 891904
    %v171 = vsel %vm170, %v159, %v161
    %v172 = vsel %vm170, %v161, %v163
    %v173 = vsel %vm170, %v163, %v165
    %v174 = vsel %vm170, %v165, %v167
    %v175 = vsel %vm170, %v167, %v169
    %v187 = vcombine.low %v50, %v50
    %v188 = vcombine.low %v51, %v51
    %v189 = vcombine.low %v52, %v52
    %v190 = vcombine.low %v53, %v53
    %191 = vrot.lane.b32.xlu0 %v187, 108
    %v192 = vpop.permute.xlu0 %191
    %193 = vrot.lane.b32.xlu0 %v50, 108
    %v194 = vpop.permute.xlu0 %193
    %195 = vrot.lane.b32.xlu0 %v188, 108
    %v196 = vpop.permute.xlu0 %195
    %197 = vrot.lane.b32.xlu0 %v51, 108
    %v198 = vpop.permute.xlu0 %197
    %199 = vrot.lane.b32.xlu0 %v189, 108
    %v200 = vpop.permute.xlu0 %199
    %201 = vrot.lane.b32.xlu0 %v52, 108
    %v202 = vpop.permute.xlu0 %201
    %203 = vrot.lane.b32.xlu0 %v190, 108
    %v204 = vpop.permute.xlu0 %203
    %vm205 = vcmask 883712
    %v206 = vsel %vm205, %v192, %v194
    %v207 = vsel %vm205, %v194, %v196
    %v208 = vsel %vm205, %v196, %v198
    %v209 = vsel %vm205, %v198, %v200
    %v210 = vsel %vm205, %v200, %v202
    %v211 = vsel %vm205, %v202, %v204
    %v219 = vcombine.high %v50, %v50
    %v220 = vcombine.high %v51, %v51
    %v221 = vcombine.high %v52, %v52
    %222 = vrot.lane.b32.xlu0 %v50, 92
    %v223 = vpop.permute.xlu0 %222
    %224 = vrot.lane.b32.xlu0 %v219, 92
    %v225 = vpop.permute.xlu0 %224
    %226 = vrot.lane.b32.xlu0 %v51, 92
    %v227 = vpop.permute.xlu0 %226
    %228 = vrot.lane.b32.xlu0 %v220, 92
    %v229 = vpop.permute.xlu0 %228
    %230 = vrot.lane.b32.xlu0 %v52, 92
    %v231 = vpop.permute.xlu0 %230
    %232 = vrot.lane.b32.xlu0 %v221, 92
    %v233 = vpop.permute.xlu0 %232
    %234 = vrot.lane.b32.xlu0 %v53, 92
    %v235 = vpop.permute.xlu0 %234
    %vm236 = vcmask 752640
    %v237 = vsel %vm236, %v223, %v225
    %v238 = vsel %vm236, %v225, %v227
    %v239 = vsel %vm236, %v227, %v229
    %v240 = vsel %vm236, %v229, %v231
    %v241 = vsel %vm236, %v231, %v233
    %v242 = vsel %vm236, %v233, %v235
    %250 = vrot.lane.b32.xlu0 %v187, 91
    %v251 = vpop.permute.xlu0 %250
    %252 = vrot.lane.b32.xlu0 %v50, 91
    %v253 = vpop.permute.xlu0 %252
    %254 = vrot.lane.b32.xlu0 %v188, 91
    %v255 = vpop.permute.xlu0 %254
    %256 = vrot.lane.b32.xlu0 %v51, 91
    %v257 = vpop.permute.xlu0 %256
    %258 = vrot.lane.b32.xlu0 %v189, 91
    %v259 = vpop.permute.xlu0 %258
    %260 = vrot.lane.b32.xlu0 %v52, 91
    %v261 = vpop.permute.xlu0 %260
    %262 = vrot.lane.b32.xlu0 %v190, 91
    %v263 = vpop.permute.xlu0 %262
    %vm264 = vcmask 744448
    %v265 = vsel %vm264, %v251, %v253
    %v266 = vsel %vm264, %v253, %v255
    %v267 = vsel %vm264, %v255, %v257
    %v268 = vsel %vm264, %v257, %v259
    %v269 = vsel %vm264, %v259, %v261
    %v270 = vsel %vm264, %v261, %v263
    %278 = vrot.lane.b32.xlu0 %v50, 90
    %v279 = vpop.permute.xlu0 %278
    %280 = vrot.lane.b32.xlu0 %v219, 90
    %v281 = vpop.permute.xlu0 %280
    %282 = vrot.lane.b32.xlu0 %v51, 90
    %v283 = vpop.permute.xlu0 %282
    %284 = vrot.lane.b32.xlu0 %v220, 90
    %v285 = vpop.permute.xlu0 %284
    %286 = vrot.lane.b32.xlu0 %v52, 90
    %v287 = vpop.permute.xlu0 %286
    %288 = vrot.lane.b32.xlu0 %v221, 90
    %v289 = vpop.permute.xlu0 %288
    %290 = vrot.lane.b32.xlu0 %v53, 90
    %v291 = vpop.permute.xlu0 %290
    %vm292 = vcmask 736256
    %v293 = vsel %vm292, %v279, %v281
    %v294 = vsel %vm292, %v281, %v283
    %v295 = vsel %vm292, %v283, %v285
    %v296 = vsel %vm292, %v285, %v287
    %v297 = vsel %vm292, %v287, %v289
    %v298 = vsel %vm292, %v289, %v291
    %vm299 = vcmask 1043456
    %v300 = vsel %vm299, %v43, %v83
    %v301 = vsel %vm299, %v58, %v84
    %v302 = vsel %vm299, %v44, %v85
    %v303 = vsel %vm299, %v59, %v86
    %v304 = vsel %vm299, %v45, %v87
    %v305 = vsel %vm299, %v60, %v88
    %v306 = vsel %vm299, %v46, %v81
    %v307 = vsel %vm299, %v111, %v139
    %v308 = vsel %vm299, %v112, %v140
    %v309 = vsel %vm299, %v113, %v141
    %v310 = vsel %vm299, %v114, %v142
    %v311 = vsel %vm299, %v115, %v143
    %v312 = vsel %vm299, %v116, %v144
    %v313 = vsel %vm299, %v109, %v137
    %v314 = vsel %vm299, %v159, %v192
    %v315 = vsel %vm299, %v171, %v206
    %v316 = vsel %vm299, %v172, %v207
    %v317 = vsel %vm299, %v173, %v208
    %v318 = vsel %vm299, %v174, %v209
    %v319 = vsel %vm299, %v175, %v210
    %v320 = vsel %vm299, %v169, %v211
    %v321 = vsel %vm299, %v223, %v251
    %v322 = vsel %vm299, %v237, %v265
    %v323 = vsel %vm299, %v238, %v266
    %v324 = vsel %vm299, %v239, %v267
    %v325 = vsel %vm299, %v240, %v268
    %v326 = vsel %vm299, %v241, %v269
    %v327 = vsel %vm299, %v242, %v270
    %v328 = vld [vmem:[%s2] sm:$0xff]
    %357 = vrot.lane.b32.xlu0 %v300, 19
    %v358 = vpop.permute.xlu0 %357
    %359 = vrot.lane.b32.xlu0 %v301, 19
    %v360 = vpop.permute.xlu0 %359
    %361 = vrot.lane.b32.xlu0 %v302, 19
    %v362 = vpop.permute.xlu0 %361
    %363 = vrot.lane.b32.xlu0 %v303, 19
    %v364 = vpop.permute.xlu0 %363
    %365 = vrot.lane.b32.xlu0 %v304, 19
    %v366 = vpop.permute.xlu0 %365
    %367 = vrot.lane.b32.xlu0 %v305, 19
    %v368 = vpop.permute.xlu0 %367
    %369 = vrot.lane.b32.xlu0 %v306, 19
    %v370 = vpop.permute.xlu0 %369
    %371 = vrot.lane.b32.xlu0 %v307, 19
    %v372 = vpop.permute.xlu0 %371
    %373 = vrot.lane.b32.xlu0 %v308, 19
    %v374 = vpop.permute.xlu0 %373
    %375 = vrot.lane.b32.xlu0 %v309, 19
    %v376 = vpop.permute.xlu0 %375
    %377 = vrot.lane.b32.xlu0 %v310, 19
    %v378 = vpop.permute.xlu0 %377
    %379 = vrot.lane.b32.xlu0 %v311, 19
    %v380 = vpop.permute.xlu0 %379
    %381 = vrot.lane.b32.xlu0 %v312, 19
    %v382 = vpop.permute.xlu0 %381
    %383 = vrot.lane.b32.xlu0 %v313, 19
    %v384 = vpop.permute.xlu0 %383
    %385 = vrot.lane.b32.xlu0 %v314, 19
    %v386 = vpop.permute.xlu0 %385
    %387 = vrot.lane.b32.xlu0 %v315, 19
    %v388 = vpop.permute.xlu0 %387
    %389 = vrot.lane.b32.xlu0 %v316, 19
    %v390 = vpop.permute.xlu0 %389
    %391 = vrot.lane.b32.xlu0 %v317, 19
    %v392 = vpop.permute.xlu0 %391
    %393 = vrot.lane.b32.xlu0 %v318, 19
    %v394 = vpop.permute.xlu0 %393
    %395 = vrot.lane.b32.xlu0 %v319, 19
    %v396 = vpop.permute.xlu0 %395
    %397 = vrot.lane.b32.xlu0 %v320, 19
    %v398 = vpop.permute.xlu0 %397
    %399 = vrot.lane.b32.xlu0 %v321, 19
    %v400 = vpop.permute.xlu0 %399
    %401 = vrot.lane.b32.xlu0 %v322, 19
    %v402 = vpop.permute.xlu0 %401
    %403 = vrot.lane.b32.xlu0 %v323, 19
    %v404 = vpop.permute.xlu0 %403
    %405 = vrot.lane.b32.xlu0 %v324, 19
    %v406 = vpop.permute.xlu0 %405
    %407 = vrot.lane.b32.xlu0 %v325, 19
    %v408 = vpop.permute.xlu0 %407
    %409 = vrot.lane.b32.xlu0 %v326, 19
    %v410 = vpop.permute.xlu0 %409
    %411 = vrot.lane.b32.xlu0 %v327, 19
    %v412 = vpop.permute.xlu0 %411
    %413 = vrot.lane.b32.xlu0 %v279, 19
    %v414 = vpop.permute.xlu0 %413
    %415 = vrot.lane.b32.xlu0 %v293, 19
    %v416 = vpop.permute.xlu0 %415
    %417 = vrot.lane.b32.xlu0 %v294, 19
    %v418 = vpop.permute.xlu0 %417
    %419 = vrot.lane.b32.xlu0 %v295, 19
    %v420 = vpop.permute.xlu0 %419
    %421 = vrot.lane.b32.xlu0 %v296, 19
    %v422 = vpop.permute.xlu0 %421
    %423 = vrot.lane.b32.xlu0 %v297, 19
    %v424 = vpop.permute.xlu0 %423
    %425 = vrot.lane.b32.xlu0 %v298, 19
    %v426 = vpop.permute.xlu0 %425
    %vm427 = vcmask 154624
    %v428 = vsel %vm427, %v358, %v360
    %v429 = vsel %vm427, %v360, %v362
    %v430 = vsel %vm427, %v362, %v364
    %v431 = vsel %vm427, %v364, %v366
    %v432 = vsel %vm427, %v366, %v368
    %v433 = vsel %vm427, %v368, %v370
    %v434 = vsel %vm427, %v372, %v374
    %v435 = vsel %vm427, %v374, %v376
    %v436 = vsel %vm427, %v376, %v378
    %v437 = vsel %vm427, %v378, %v380
    %v438 = vsel %vm427, %v380, %v382
    %v439 = vsel %vm427, %v382, %v384
    %v440 = vsel %vm427, %v386, %v388
    %v441 = vsel %vm427, %v388, %v390
    %v442 = vsel %vm427, %v390, %v392
    %v443 = vsel %vm427, %v392, %v394
    %v444 = vsel %vm427, %v394, %v396
    %v445 = vsel %vm427, %v396, %v398
    %v446 = vsel %vm427, %v400, %v402
    %v447 = vsel %vm427, %v402, %v404
    %v448 = vsel %vm427, %v404, %v406
    %v449 = vsel %vm427, %v406, %v408
    %v450 = vsel %vm427, %v408, %v410
    %v451 = vsel %vm427, %v410, %v412
    %v452 = vsel %vm427, %v414, %v416
    %v453 = vsel %vm427, %v416, %v418
    %v454 = vsel %vm427, %v418, %v420
    %v455 = vsel %vm427, %v420, %v422
    %v456 = vsel %vm427, %v422, %v424
    %v457 = vsel %vm427, %v424, %v426
    %vm482 = vcmask 293888
    %v484 = vsel %vm482, %v328, 0
    %v486 = vsel %vm299, %v452, 0
    %v488 = vsel %vm299, %v453, 0
    %v490 = vsel %vm299, %v454, 0
    %v492 = vsel %vm299, %v455, 0
    %v494 = vsel %vm299, %v456, 0
    %v496 = vsel %vm299, %v457, 0
    %498 = vmatprep.subr.mxu0 %v429
    %499 = vmatpush1.msra.mxu0 %v428
    %500 = vmatprep.subr.mxu0 %v435
    %501 = vmatpush1.msra.mxu0 %v434
    %502 = vmatprep.subr.mxu0 %v441
    %503 = vmatpush1.msra.mxu0 %v440
    %504 = vmatprep.subr.mxu0 %v447
    %505 = vmatpush1.msra.mxu0 %v446
    %506 = vmatprep.subr.mxu0 %v488
    %507 = vmatpush1.msra.mxu0 %v486
    %508 = vmatprep.subr.mxu0 0.0
    %509 = vmatpush1.msra.mxu0 0.0
    %510 = vmatprep.subr.mxu0 0.0
    %511 = vmatpush1.msra.mxu0 0.0
    %512 = vmatprep.subr.mxu0 0.0
    %513 = vmatpush1.msra.mxu0 0.0
    %514 = vmatprep.subr.mxu0 0.0
    %515 = vmatpush1.msra.mxu0 0.0
    %516 = vmatprep.subr.mxu0 0.0
    %517 = vmatpush1.msra.mxu0 0.0
    %518 = vmatprep.subr.mxu0 0.0
    %519 = vmatpush1.msra.mxu0 0.0
    %520 = vmatprep.subr.mxu0 0.0
    %521 = vmatpush1.msra.mxu0 0.0
    %522 = vmatprep.subr.mxu0 0.0
    %523 = vmatpush1.msra.mxu0 0.0
    %524 = vmatprep.subr.mxu0 0.0
    %525 = vmatpush1.msra.mxu0 0.0
    %526 = vmatprep.subr.mxu0 0.0
    %527 = vmatpush1.msra.mxu0 0.0
    %528 = vmatprep.subr.mxu0 0.0
    %529 = vmatpush1.msra.mxu0 0.0
    %530 = vmatprep.subr.mxu0 0.0
    %531 = vmatpush1.msra.mxu0 0.0
    %532 = vmatprep.subr.mxu0 0.0
    %533 = vmatpush1.msra.mxu0 0.0
    %534 = vmatprep.subr.mxu0 0.0
    %535 = vmatpush1.msra.mxu0 0.0
    %536 = vmatprep.subr.mxu0 0.0
    %537 = vmatpush1.msra.mxu0 0.0
    %538 = vmatprep.subr.mxu0 0.0
    %539 = vmatpush1.msra.mxu0 0.0
    %540 = vmatprep.subr.mxu0 0.0
    %541 = vmatpush1.msra.mxu0 0.0
    %542 = vmatprep.subr.mxu0 0.0
    %543 = vmatpush1.msra.mxu0 0.0
    %544 = vmatprep.subr.mxu0 0.0
    %545 = vmatpush1.msra.mxu0 0.0
    %546 = vmatprep.subr.mxu0 0.0
    %547 = vmatpush1.msra.mxu0 0.0
    %548 = vmatprep.subr.mxu0 0.0
    %549 = vmatpush1.msra.mxu0 0.0
    %550 = vmatprep.subr.mxu0 0.0
    %551 = vmatpush1.msra.mxu0 0.0
    %552 = vmatprep.subr.mxu0 0.0
    %553 = vmatpush1.msra.mxu0 0.0
    %554 = vmatprep.subr.mxu0 0.0
    %555 = vmatpush1.msra.mxu0 0.0
    %556 = vmatprep.subr.mxu0 0.0
    %557 = vmatpush1.msra.mxu0 0.0
    %558 = vmatprep.subr.mxu0 0.0
    %559 = vmatpush1.msra.mxu0 0.0
    %560 = vmatprep.subr.mxu0 0.0
    %561 = vmatpush1.msra.mxu0 0.0
    %562 = vmatprep.mubr.f32.mxu0 0.0
    %563 = vmatmul.mubr.f32.gmra.mrb[0].mxu0 %v484
    %v564 = vpop.f32.mrb[0].mxu0
    %v565 = vadd.f32 0.0, %v564
    %v566 = vpop.f32.mrb[0].mxu0
    %v567 = vadd.f32 0.0, %v566
    %568 = vdwg.mxu0
    %569 = vmatprep.subr.mxu0 %v431
    %570 = vmatpush1.msra.mxu0 %v430
    %571 = vmatprep.subr.mxu0 %v437
    %572 = vmatpush1.msra.mxu0 %v436
    %573 = vmatprep.subr.mxu0 %v443
    %574 = vmatpush1.msra.mxu0 %v442
    %575 = vmatprep.subr.mxu0 %v449
    %576 = vmatpush1.msra.mxu0 %v448
    %577 = vmatprep.subr.mxu0 %v492
    %578 = vmatpush1.msra.mxu0 %v490
    %579 = vmatprep.subr.mxu0 0.0
    %580 = vmatpush1.msra.mxu0 0.0
    %581 = vmatprep.subr.mxu0 0.0
    %582 = vmatpush1.msra.mxu0 0.0
    %583 = vmatprep.subr.mxu0 0.0
    %584 = vmatpush1.msra.mxu0 0.0
    %585 = vmatprep.subr.mxu0 0.0
    %586 = vmatpush1.msra.mxu0 0.0
    %587 = vmatprep.subr.mxu0 0.0
    %588 = vmatpush1.msra.mxu0 0.0
    %589 = vmatprep.subr.mxu0 0.0
    %590 = vmatpush1.msra.mxu0 0.0
    %591 = vmatprep.subr.mxu0 0.0
    %592 = vmatpush1.msra.mxu0 0.0
    %593 = vmatprep.subr.mxu0 0.0
    %594 = vmatpush1.msra.mxu0 0.0
    %595 = vmatprep.subr.mxu0 0.0
    %596 = vmatpush1.msra.mxu0 0.0
    %597 = vmatprep.subr.mxu0 0.0
    %598 = vmatpush1.msra.mxu0 0.0
    %599 = vmatprep.subr.mxu0 0.0
    %600 = vmatpush1.msra.mxu0 0.0
    %601 = vmatprep.subr.mxu0 0.0
    %602 = vmatpush1.msra.mxu0 0.0
    %603 = vmatprep.subr.mxu0 0.0
    %604 = vmatpush1.msra.mxu0 0.0
    %605 = vmatprep.subr.mxu0 0.0
    %606 = vmatpush1.msra.mxu0 0.0
    %607 = vmatprep.subr.mxu0 0.0
    %608 = vmatpush1.msra.mxu0 0.0
    %609 = vmatprep.subr.mxu0 0.0
    %610 = vmatpush1.msra.mxu0 0.0
    %611 = vmatprep.subr.mxu0 0.0
    %612 = vmatpush1.msra.mxu0 0.0
    %613 = vmatprep.subr.mxu0 0.0
    %614 = vmatpush1.msra.mxu0 0.0
    %615 = vmatprep.subr.mxu0 0.0
    %616 = vmatpush1.msra.mxu0 0.0
    %617 = vmatprep.subr.mxu0 0.0
    %618 = vmatpush1.msra.mxu0 0.0
    %619 = vmatprep.subr.mxu0 0.0
    %620 = vmatpush1.msra.mxu0 0.0
    %621 = vmatprep.subr.mxu0 0.0
    %622 = vmatpush1.msra.mxu0 0.0
    %623 = vmatprep.subr.mxu0 0.0
    %624 = vmatpush1.msra.mxu0 0.0
    %625 = vmatprep.subr.mxu0 0.0
    %626 = vmatpush1.msra.mxu0 0.0
    %627 = vmatprep.subr.mxu0 0.0
    %628 = vmatpush1.msra.mxu0 0.0
    %629 = vmatprep.subr.mxu0 0.0
    %630 = vmatpush1.msra.mxu0 0.0
    %631 = vmatprep.subr.mxu0 0.0
    %632 = vmatpush1.msra.mxu0 0.0
    %633 = vmatprep.mubr.f32.mxu0 0.0
    %634 = vmatmul.mubr.f32.gmra.mrb[0].mxu0 %v484
    %v635 = vpop.f32.mrb[0].mxu0
    %v636 = vadd.f32 0.0, %v635
    %v637 = vpop.f32.mrb[0].mxu0
    %v638 = vadd.f32 0.0, %v637
    %639 = vdwg.mxu0
    %640 = vmatprep.subr.mxu0 %v433
    %641 = vmatpush1.msra.mxu0 %v432
    %642 = vmatprep.subr.mxu0 %v439
    %643 = vmatpush1.msra.mxu0 %v438
    %644 = vmatprep.subr.mxu0 %v445
    %645 = vmatpush1.msra.mxu0 %v444
    %646 = vmatprep.subr.mxu0 %v451
    %647 = vmatpush1.msra.mxu0 %v450
    %648 = vmatprep.subr.mxu0 %v496
    %649 = vmatpush1.msra.mxu0 %v494
    %650 = vmatprep.subr.mxu0 0.0
    %651 = vmatpush1.msra.mxu0 0.0
    %652 = vmatprep.subr.mxu0 0.0
    %653 = vmatpush1.msra.mxu0 0.0
    %654 = vmatprep.subr.mxu0 0.0
    %655 = vmatpush1.msra.mxu0 0.0
    %656 = vmatprep.subr.mxu0 0.0
    %657 = vmatpush1.msra.mxu0 0.0
    %658 = vmatprep.subr.mxu0 0.0
    %659 = vmatpush1.msra.mxu0 0.0
    %660 = vmatprep.subr.mxu0 0.0
    %661 = vmatpush1.msra.mxu0 0.0
    %662 = vmatprep.subr.mxu0 0.0
    %663 = vmatpush1.msra.mxu0 0.0
    %664 = vmatprep.subr.mxu0 0.0
    %665 = vmatpush1.msra.mxu0 0.0
    %666 = vmatprep.subr.mxu0 0.0
    %667 = vmatpush1.msra.mxu0 0.0
    %668 = vmatprep.subr.mxu0 0.0
    %669 = vmatpush1.msra.mxu0 0.0
    %670 = vmatprep.subr.mxu0 0.0
    %671 = vmatpush1.msra.mxu0 0.0
    %672 = vmatprep.subr.mxu0 0.0
    %673 = vmatpush1.msra.mxu0 0.0
    %674 = vmatprep.subr.mxu0 0.0
    %675 = vmatpush1.msra.mxu0 0.0
    %676 = vmatprep.subr.mxu0 0.0
    %677 = vmatpush1.msra.mxu0 0.0
    %678 = vmatprep.subr.mxu0 0.0
    %679 = vmatpush1.msra.mxu0 0.0
    %680 = vmatprep.subr.mxu0 0.0
    %681 = vmatpush1.msra.mxu0 0.0
    %682 = vmatprep.subr.mxu0 0.0
    %683 = vmatpush1.msra.mxu0 0.0
    %684 = vmatprep.subr.mxu0 0.0
    %685 = vmatpush1.msra.mxu0 0.0
    %686 = vmatprep.subr.mxu0 0.0
    %687 = vmatpush1.msra.mxu0 0.0
    %688 = vmatprep.subr.mxu0 0.0
    %689 = vmatpush1.msra.mxu0 0.0
    %690 = vmatprep.subr.mxu0 0.0
    %691 = vmatpush1.msra.mxu0 0.0
    %692 = vmatprep.subr.mxu0 0.0
    %693 = vmatpush1.msra.mxu0 0.0
    %694 = vmatprep.subr.mxu0 0.0
    %695 = vmatpush1.msra.mxu0 0.0
    %696 = vmatprep.subr.mxu0 0.0
    %697 = vmatpush1.msra.mxu0 0.0
    %698 = vmatprep.subr.mxu0 0.0
    %699 = vmatpush1.msra.mxu0 0.0
    %700 = vmatprep.subr.mxu0 0.0
    %701 = vmatpush1.msra.mxu0 0.0
    %702 = vmatprep.subr.mxu0 0.0
    %703 = vmatpush1.msra.mxu0 0.0
    %704 = vmatprep.mubr.f32.mxu0 0.0
    %705 = vmatmul.mubr.f32.gmra.mrb[0].mxu0 %v484
    %v706 = vpop.f32.mrb[0].mxu0
    %v707 = vadd.f32 0.0, %v706
    %v708 = vpop.f32.mrb[0].mxu0
    %v709 = vadd.f32 0.0, %v708
    %710 = vdwg.mxu0
    %v712 = vlaneseq
    %v713 = vshrl.u32 %v712, 7
    %v714 = vsub.s32 0, %v713
    %v715 = vrot.slane %v42, %v714
    %v716 = vlaneseq
    %v717 = vshrl.u32 %v716, 7
    %v718 = vsub.s32 1, %v717
    %v719 = vrot.slane %v42, %v718
    %v720 = vlaneseq
    %v721 = vshrl.u32 %v720, 7
    %v722 = vsub.s32 2, %v721
    %v723 = vrot.slane %v42, %v722
    %v724 = vlaneseq
    %v725 = vshrl.u32 %v724, 7
    %v726 = vsub.s32 3, %v725
    %v727 = vrot.slane %v42, %v726
    %v728 = vlaneseq
    %v729 = vshrl.u32 %v728, 7
    %v730 = vsub.s32 4, %v729
    %v731 = vrot.slane %v42, %v730
    %v732 = vlaneseq
    %v733 = vshrl.u32 %v732, 7
    %v734 = vsub.s32 5, %v733
    %v735 = vrot.slane %v42, %v734
    %v742 = vmul.f32 %v565, %v715
    %v743 = vmul.f32 %v567, %v719
    %v744 = vmul.f32 %v636, %v723
    %v745 = vmul.f32 %v638, %v727
    %v746 = vmul.f32 %v707, %v731
    %v747 = vmul.f32 %v709, %v735
    %v748 = vadd.f32 %v742, %v743
    %v749 = vadd.f32 %v748, %v744
    %v750 = vadd.f32 %v749, %v745
    %v751 = vadd.f32 %v750, %v746
    %v752 = vadd.f32 %v751, %v747
    %753 = vadd.xlane.f32.xlu0 %v752
    %v754 = vpop.xlane.xlu0 %753
    %v755 = vmul.f32 %v754, 0.001953125
    %v756 = vmul.f32 %v742, %v565
    %v757 = vmul.f32 %v743, %v567
    %v758 = vmul.f32 %v744, %v636
    %v759 = vmul.f32 %v745, %v638
    %v760 = vmul.f32 %v746, %v707
    %v761 = vmul.f32 %v747, %v709
    %v762 = vadd.f32 %v756, %v757
    %v763 = vadd.f32 %v762, %v758
    %v764 = vadd.f32 %v763, %v759
    %v765 = vadd.f32 %v764, %v760
    %v766 = vadd.f32 %v765, %v761
    %767 = vadd.xlane.f32.xlu0 %v766
    %v768 = vpop.xlane.xlu0 %767
    %v769 = vmul.f32 %v768, 0.001953125
    %v770 = vmul.f32 %v755, %v755
    %v771 = vsub.f32 %v769, %v770
    %v772 = vld [vmem:[%s3] sm:$0xff]
    %v773 = vadd.f32 %v771, 1e-05
    %v774 = vrsqrt.pop %v773
    %v775 = vmul.f32 %v772, %v774
    %v776 = vld [vmem:[%s4] sm:$0xff]
    %v777 = vmul.f32 %v755, %v775
    %v778 = vsub.f32 %v776, %v777
    %780 = vset.pattern.permute.xlu0 0
    %781 = vperm.xlu0 %780, %v775
    %v782 = vpop.permute.xlu0 %781
    %v784 = vmul.f32 %v565, %v782
    %v785 = vmul.f32 %v567, %v782
    %v786 = vmul.f32 %v636, %v782
    %v787 = vmul.f32 %v638, %v782
    %v788 = vmul.f32 %v707, %v782
    %v789 = vmul.f32 %v709, %v782
    %791 = vset.pattern.permute.xlu0 0
    %792 = vperm.xlu0 %791, %v778
    %v793 = vpop.permute.xlu0 %792
    %v795 = vadd.f32 %v784, %v793
    %v796 = vadd.f32 %v785, %v793
    %v797 = vadd.f32 %v786, %v793
    %v798 = vadd.f32 %v787, %v793
    %v799 = vadd.f32 %v788, %v793
    %v800 = vadd.f32 %v789, %v793
    %v801 = vmax.f32 %v795, 0.0
    %v802 = vmax.f32 %v796, 0.0
    %v803 = vmax.f32 %v797, 0.0
    %v804 = vmax.f32 %v798, 0.0
    %v805 = vmax.f32 %v799, 0.0
    %v806 = vmax.f32 %v800, 0.0
    %v807 = vmul.f32 %v801, %v715
    %v808 = vmul.f32 %v802, %v719
    %v809 = vmul.f32 %v803, %v723
    %v810 = vmul.f32 %v804, %v727
    %v811 = vmul.f32 %v805, %v731
    %v812 = vmul.f32 %v806, %v735
    %813 = vst [vmem:[#allocation2] sm:$0xff] 0.0
    %814 = vst [vmem:[#allocation2 + $0x38] sm:$0xff] 0.0
    %815 = vst [vmem:[#allocation2 + $0x8] sm:$0xff] %v807
    %816 = vst [vmem:[#allocation2 + $0x10] sm:$0xff] %v808
    %817 = vst [vmem:[#allocation2 + $0x18] sm:$0xff] %v809
    %818 = vst [vmem:[#allocation2 + $0x20] sm:$0xff] %v810
    %819 = vst [vmem:[#allocation2 + $0x28] sm:$0xff] %v811
    %820 = vst [vmem:[#allocation2 + $0x30] sm:$0xff] %v812
    %v821 = vld [vmem:[#allocation2] sm:$0xff]
    %v822 = vld [vmem:[#allocation2 + $0x8] sm:$0xff]
    %v823 = vld [vmem:[#allocation2 + $0x10] sm:$0xff]
    %v824 = vld [vmem:[#allocation2 + $0x18] sm:$0xff]
    %v825 = vld [vmem:[#allocation2 + $0x20] sm:$0xff]
    %v826 = vld [vmem:[#allocation2 + $0x28] sm:$0xff]
    %v827 = vld [vmem:[#allocation2 + $0x30] sm:$0xff]
    %v828 = vld [vmem:[#allocation2 + $0x8] sm:$0xff]
    %v829 = vld [vmem:[#allocation2 + $0x10] sm:$0xff]
    %v830 = vld [vmem:[#allocation2 + $0x18] sm:$0xff]
    %v831 = vld [vmem:[#allocation2 + $0x20] sm:$0xff]
    %v832 = vld [vmem:[#allocation2 + $0x28] sm:$0xff]
    %v833 = vld [vmem:[#allocation2 + $0x30] sm:$0xff]
    %v834 = vld [vmem:[#allocation2 + $0x38] sm:$0xff]
    %842 = vrot.lane.b32.xlu0 %v821, 127
    %v843 = vpop.permute.xlu0 %842
    %844 = vrot.lane.b32.xlu0 %v822, 127
    %v845 = vpop.permute.xlu0 %844
    %846 = vrot.lane.b32.xlu0 %v823, 127
    %v847 = vpop.permute.xlu0 %846
    %848 = vrot.lane.b32.xlu0 %v824, 127
    %v849 = vpop.permute.xlu0 %848
    %850 = vrot.lane.b32.xlu0 %v825, 127
    %v851 = vpop.permute.xlu0 %850
    %852 = vrot.lane.b32.xlu0 %v826, 127
    %v853 = vpop.permute.xlu0 %852
    %854 = vrot.lane.b32.xlu0 %v827, 127
    %v855 = vpop.permute.xlu0 %854
    %v856 = vsel %vm82, %v843, %v845
    %v857 = vsel %vm82, %v845, %v847
    %v858 = vsel %vm82, %v847, %v849
    %v859 = vsel %vm82, %v849, %v851
    %v860 = vsel %vm82, %v851, %v853
    %v861 = vsel %vm82, %v853, %v855
    %862 = vrot.lane.b32.xlu0 %v821, 126
    %v863 = vpop.permute.xlu0 %862
    %864 = vrot.lane.b32.xlu0 %v822, 126
    %v865 = vpop.permute.xlu0 %864
    %866 = vrot.lane.b32.xlu0 %v823, 126
    %v867 = vpop.permute.xlu0 %866
    %868 = vrot.lane.b32.xlu0 %v824, 126
    %v869 = vpop.permute.xlu0 %868
    %870 = vrot.lane.b32.xlu0 %v825, 126
    %v871 = vpop.permute.xlu0 %870
    %872 = vrot.lane.b32.xlu0 %v826, 126
    %v873 = vpop.permute.xlu0 %872
    %874 = vrot.lane.b32.xlu0 %v827, 126
    %v875 = vpop.permute.xlu0 %874
    %v876 = vsel %vm110, %v863, %v865
    %v877 = vsel %vm110, %v865, %v867
    %v878 = vsel %vm110, %v867, %v869
    %v879 = vsel %vm110, %v869, %v871
    %v880 = vsel %vm110, %v871, %v873
    %v881 = vsel %vm110, %v873, %v875
    %882 = vrot.lane.b32.xlu0 %v821, 110
    %v883 = vpop.permute.xlu0 %882
    %884 = vrot.lane.b32.xlu0 %v822, 110
    %v885 = vpop.permute.xlu0 %884
    %886 = vrot.lane.b32.xlu0 %v823, 110
    %v887 = vpop.permute.xlu0 %886
    %888 = vrot.lane.b32.xlu0 %v824, 110
    %v889 = vpop.permute.xlu0 %888
    %890 = vrot.lane.b32.xlu0 %v825, 110
    %v891 = vpop.permute.xlu0 %890
    %892 = vrot.lane.b32.xlu0 %v826, 110
    %v893 = vpop.permute.xlu0 %892
    %894 = vrot.lane.b32.xlu0 %v827, 110
    %v895 = vpop.permute.xlu0 %894
    %v896 = vsel %vm138, %v883, %v885
    %v897 = vsel %vm138, %v885, %v887
    %v898 = vsel %vm138, %v887, %v889
    %v899 = vsel %vm138, %v889, %v891
    %v900 = vsel %vm138, %v891, %v893
    %v901 = vsel %vm138, %v893, %v895
    %902 = vrot.lane.b32.xlu0 %v822, 109
    %v903 = vpop.permute.xlu0 %902
    %904 = vrot.lane.b32.xlu0 %v823, 109
    %v905 = vpop.permute.xlu0 %904
    %906 = vrot.lane.b32.xlu0 %v824, 109
    %v907 = vpop.permute.xlu0 %906
    %908 = vrot.lane.b32.xlu0 %v825, 109
    %v909 = vpop.permute.xlu0 %908
    %910 = vrot.lane.b32.xlu0 %v826, 109
    %v911 = vpop.permute.xlu0 %910
    %912 = vrot.lane.b32.xlu0 %v827, 109
    %v913 = vpop.permute.xlu0 %912
    %v914 = vsel %vm170, %v903, %v905
    %v915 = vsel %vm170, %v905, %v907
    %v916 = vsel %vm170, %v907, %v909
    %v917 = vsel %vm170, %v909, %v911
    %v918 = vsel %vm170, %v911, %v913
    %926 = vrot.lane.b32.xlu0 %v828, 108
    %v927 = vpop.permute.xlu0 %926
    %928 = vrot.lane.b32.xlu0 %v829, 108
    %v929 = vpop.permute.xlu0 %928
    %930 = vrot.lane.b32.xlu0 %v830, 108
    %v931 = vpop.permute.xlu0 %930
    %932 = vrot.lane.b32.xlu0 %v831, 108
    %v933 = vpop.permute.xlu0 %932
    %934 = vrot.lane.b32.xlu0 %v832, 108
    %v935 = vpop.permute.xlu0 %934
    %936 = vrot.lane.b32.xlu0 %v833, 108
    %v937 = vpop.permute.xlu0 %936
    %938 = vrot.lane.b32.xlu0 %v834, 108
    %v939 = vpop.permute.xlu0 %938
    %v940 = vsel %vm205, %v927, %v929
    %v941 = vsel %vm205, %v929, %v931
    %v942 = vsel %vm205, %v931, %v933
    %v943 = vsel %vm205, %v933, %v935
    %v944 = vsel %vm205, %v935, %v937
    %v945 = vsel %vm205, %v937, %v939
    %946 = vrot.lane.b32.xlu0 %v828, 92
    %v947 = vpop.permute.xlu0 %946
    %948 = vrot.lane.b32.xlu0 %v829, 92
    %v949 = vpop.permute.xlu0 %948
    %950 = vrot.lane.b32.xlu0 %v830, 92
    %v951 = vpop.permute.xlu0 %950
    %952 = vrot.lane.b32.xlu0 %v831, 92
    %v953 = vpop.permute.xlu0 %952
    %954 = vrot.lane.b32.xlu0 %v832, 92
    %v955 = vpop.permute.xlu0 %954
    %956 = vrot.lane.b32.xlu0 %v833, 92
    %v957 = vpop.permute.xlu0 %956
    %958 = vrot.lane.b32.xlu0 %v834, 92
    %v959 = vpop.permute.xlu0 %958
    %v960 = vsel %vm236, %v947, %v949
    %v961 = vsel %vm236, %v949, %v951
    %v962 = vsel %vm236, %v951, %v953
    %v963 = vsel %vm236, %v953, %v955
    %v964 = vsel %vm236, %v955, %v957
    %v965 = vsel %vm236, %v957, %v959
    %966 = vrot.lane.b32.xlu0 %v828, 91
    %v967 = vpop.permute.xlu0 %966
    %968 = vrot.lane.b32.xlu0 %v829, 91
    %v969 = vpop.permute.xlu0 %968
    %970 = vrot.lane.b32.xlu0 %v830, 91
    %v971 = vpop.permute.xlu0 %970
    %972 = vrot.lane.b32.xlu0 %v831, 91
    %v973 = vpop.permute.xlu0 %972
    %974 = vrot.lane.b32.xlu0 %v832, 91
    %v975 = vpop.permute.xlu0 %974
    %976 = vrot.lane.b32.xlu0 %v833, 91
    %v977 = vpop.permute.xlu0 %976
    %978 = vrot.lane.b32.xlu0 %v834, 91
    %v979 = vpop.permute.xlu0 %978
    %v980 = vsel %vm264, %v967, %v969
    %v981 = vsel %vm264, %v969, %v971
    %v982 = vsel %vm264, %v971, %v973
    %v983 = vsel %vm264, %v973, %v975
    %v984 = vsel %vm264, %v975, %v977
    %v985 = vsel %vm264, %v977, %v979
    %986 = vrot.lane.b32.xlu0 %v828, 90
    %v987 = vpop.permute.xlu0 %986
    %988 = vrot.lane.b32.xlu0 %v829, 90
    %v989 = vpop.permute.xlu0 %988
    %990 = vrot.lane.b32.xlu0 %v830, 90
    %v991 = vpop.permute.xlu0 %990
    %992 = vrot.lane.b32.xlu0 %v831, 90
    %v993 = vpop.permute.xlu0 %992
    %994 = vrot.lane.b32.xlu0 %v832, 90
    %v995 = vpop.permute.xlu0 %994
    %996 = vrot.lane.b32.xlu0 %v833, 90
    %v997 = vpop.permute.xlu0 %996
    %998 = vrot.lane.b32.xlu0 %v834, 90
    %v999 = vpop.permute.xlu0 %998
    %v1000 = vsel %vm292, %v987, %v989
    %v1001 = vsel %vm292, %v989, %v991
    %v1002 = vsel %vm292, %v991, %v993
    %v1003 = vsel %vm292, %v993, %v995
    %v1004 = vsel %vm292, %v995, %v997
    %v1005 = vsel %vm292, %v997, %v999
    %v1006 = vld [vmem:[%s5] sm:$0xff]
    %1007 = vrot.lane.b32.xlu0 %v821, 19
    %v1008 = vpop.permute.xlu0 %1007
    %1009 = vrot.lane.b32.xlu0 %v822, 19
    %v1010 = vpop.permute.xlu0 %1009
    %1011 = vrot.lane.b32.xlu0 %v823, 19
    %v1012 = vpop.permute.xlu0 %1011
    %1013 = vrot.lane.b32.xlu0 %v824, 19
    %v1014 = vpop.permute.xlu0 %1013
    %1015 = vrot.lane.b32.xlu0 %v825, 19
    %v1016 = vpop.permute.xlu0 %1015
    %1017 = vrot.lane.b32.xlu0 %v826, 19
    %v1018 = vpop.permute.xlu0 %1017
    %1019 = vrot.lane.b32.xlu0 %v827, 19
    %v1020 = vpop.permute.xlu0 %1019
    %1021 = vrot.lane.b32.xlu0 %v856, 19
    %v1022 = vpop.permute.xlu0 %1021
    %1023 = vrot.lane.b32.xlu0 %v857, 19
    %v1024 = vpop.permute.xlu0 %1023
    %1025 = vrot.lane.b32.xlu0 %v858, 19
    %v1026 = vpop.permute.xlu0 %1025
    %1027 = vrot.lane.b32.xlu0 %v859, 19
    %v1028 = vpop.permute.xlu0 %1027
    %1029 = vrot.lane.b32.xlu0 %v860, 19
    %v1030 = vpop.permute.xlu0 %1029
    %1031 = vrot.lane.b32.xlu0 %v861, 19
    %v1032 = vpop.permute.xlu0 %1031
    %1033 = vrot.lane.b32.xlu0 %v855, 19
    %v1034 = vpop.permute.xlu0 %1033
    %1035 = vrot.lane.b32.xlu0 %v876, 19
    %v1036 = vpop.permute.xlu0 %1035
    %1037 = vrot.lane.b32.xlu0 %v877, 19
    %v1038 = vpop.permute.xlu0 %1037
    %1039 = vrot.lane.b32.xlu0 %v878, 19
    %v1040 = vpop.permute.xlu0 %1039
    %1041 = vrot.lane.b32.xlu0 %v879, 19
    %v1042 = vpop.permute.xlu0 %1041
    %1043 = vrot.lane.b32.xlu0 %v880, 19
    %v1044 = vpop.permute.xlu0 %1043
    %1045 = vrot.lane.b32.xlu0 %v881, 19
    %v1046 = vpop.permute.xlu0 %1045
    %1047 = vrot.lane.b32.xlu0 %v875, 19
    %v1048 = vpop.permute.xlu0 %1047
    %1049 = vrot.lane.b32.xlu0 %v896, 19
    %v1050 = vpop.permute.xlu0 %1049
    %1051 = vrot.lane.b32.xlu0 %v897, 19
    %v1052 = vpop.permute.xlu0 %1051
    %1053 = vrot.lane.b32.xlu0 %v898, 19
    %v1054 = vpop.permute.xlu0 %1053
    %1055 = vrot.lane.b32.xlu0 %v899, 19
    %v1056 = vpop.permute.xlu0 %1055
    %1057 = vrot.lane.b32.xlu0 %v900, 19
    %v1058 = vpop.permute.xlu0 %1057
    %1059 = vrot.lane.b32.xlu0 %v901, 19
    %v1060 = vpop.permute.xlu0 %1059
    %1061 = vrot.lane.b32.xlu0 %v895, 19
    %v1062 = vpop.permute.xlu0 %1061
    %1063 = vrot.lane.b32.xlu0 %v903, 19
    %v1064 = vpop.permute.xlu0 %1063
    %1065 = vrot.lane.b32.xlu0 %v914, 19
    %v1066 = vpop.permute.xlu0 %1065
    %1067 = vrot.lane.b32.xlu0 %v915, 19
    %v1068 = vpop.permute.xlu0 %1067
    %1069 = vrot.lane.b32.xlu0 %v916, 19
    %v1070 = vpop.permute.xlu0 %1069
    %1071 = vrot.lane.b32.xlu0 %v917, 19
    %v1072 = vpop.permute.xlu0 %1071
    %1073 = vrot.lane.b32.xlu0 %v918, 19
    %v1074 = vpop.permute.xlu0 %1073
    %1075 = vrot.lane.b32.xlu0 %v913, 19
    %v1076 = vpop.permute.xlu0 %1075
    %1077 = vrot.lane.b32.xlu0 %v927, 19
    %v1078 = vpop.permute.xlu0 %1077
    %1079 = vrot.lane.b32.xlu0 %v940, 19
    %v1080 = vpop.permute.xlu0 %1079
    %1081 = vrot.lane.b32.xlu0 %v941, 19
    %v1082 = vpop.permute.xlu0 %1081
    %1083 = vrot.lane.b32.xlu0 %v942, 19
    %v1084 = vpop.permute.xlu0 %1083
    %1085 = vrot.lane.b32.xlu0 %v943, 19
    %v1086 = vpop.permute.xlu0 %1085
    %1087 = vrot.lane.b32.xlu0 %v944, 19
    %v1088 = vpop.permute.xlu0 %1087
    %1089 = vrot.lane.b32.xlu0 %v945, 19
    %v1090 = vpop.permute.xlu0 %1089
    %1091 = vrot.lane.b32.xlu0 %v947, 19
    %v1092 = vpop.permute.xlu0 %1091
    %1093 = vrot.lane.b32.xlu0 %v960, 19
    %v1094 = vpop.permute.xlu0 %1093
    %1095 = vrot.lane.b32.xlu0 %v961, 19
    %v1096 = vpop.permute.xlu0 %1095
    %1097 = vrot.lane.b32.xlu0 %v962, 19
    %v1098 = vpop.permute.xlu0 %1097
    %1099 = vrot.lane.b32.xlu0 %v963, 19
    %v1100 = vpop.permute.xlu0 %1099
    %1101 = vrot.lane.b32.xlu0 %v964, 19
    %v1102 = vpop.permute.xlu0 %1101
    %1103 = vrot.lane.b32.xlu0 %v965, 19
    %v1104 = vpop.permute.xlu0 %1103
    %1105 = vrot.lane.b32.xlu0 %v967, 19
    %v1106 = vpop.permute.xlu0 %1105
    %1107 = vrot.lane.b32.xlu0 %v980, 19
    %v1108 = vpop.permute.xlu0 %1107
    %1109 = vrot.lane.b32.xlu0 %v981, 19
    %v1110 = vpop.permute.xlu0 %1109
    %1111 = vrot.lane.b32.xlu0 %v982, 19
    %v1112 = vpop.permute.xlu0 %1111
    %1113 = vrot.lane.b32.xlu0 %v983, 19
    %v1114 = vpop.permute.xlu0 %1113
    %1115 = vrot.lane.b32.xlu0 %v984, 19
    %v1116 = vpop.permute.xlu0 %1115
    %1117 = vrot.lane.b32.xlu0 %v985, 19
    %v1118 = vpop.permute.xlu0 %1117
    %1119 = vrot.lane.b32.xlu0 %v987, 19
    %v1120 = vpop.permute.xlu0 %1119
    %1121 = vrot.lane.b32.xlu0 %v1000, 19
    %v1122 = vpop.permute.xlu0 %1121
    %1123 = vrot.lane.b32.xlu0 %v1001, 19
    %v1124 = vpop.permute.xlu0 %1123
    %1125 = vrot.lane.b32.xlu0 %v1002, 19
    %v1126 = vpop.permute.xlu0 %1125
    %1127 = vrot.lane.b32.xlu0 %v1003, 19
    %v1128 = vpop.permute.xlu0 %1127
    %1129 = vrot.lane.b32.xlu0 %v1004, 19
    %v1130 = vpop.permute.xlu0 %1129
    %1131 = vrot.lane.b32.xlu0 %v1005, 19
    %v1132 = vpop.permute.xlu0 %1131
    %v1133 = vsel %vm427, %v1008, %v1010
    %v1134 = vsel %vm427, %v1010, %v1012
    %v1135 = vsel %vm427, %v1012, %v1014
    %v1136 = vsel %vm427, %v1014, %v1016
    %v1137 = vsel %vm427, %v1016, %v1018
    %v1138 = vsel %vm427, %v1018, %v1020
    %v1139 = vsel %vm427, %v1022, %v1024
    %v1140 = vsel %vm427, %v1024, %v1026
    %v1141 = vsel %vm427, %v1026, %v1028
    %v1142 = vsel %vm427, %v1028, %v1030
    %v1143 = vsel %vm427, %v1030, %v1032
    %v1144 = vsel %vm427, %v1032, %v1034
    %v1145 = vsel %vm427, %v1036, %v1038
    %v1146 = vsel %vm427, %v1038, %v1040
    %v1147 = vsel %vm427, %v1040, %v1042
    %v1148 = vsel %vm427, %v1042, %v1044
    %v1149 = vsel %vm427, %v1044, %v1046
    %v1150 = vsel %vm427, %v1046, %v1048
    %v1151 = vsel %vm427, %v1050, %v1052
    %v1152 = vsel %vm427, %v1052, %v1054
    %v1153 = vsel %vm427, %v1054, %v1056
    %v1154 = vsel %vm427, %v1056, %v1058
    %v1155 = vsel %vm427, %v1058, %v1060
    %v1156 = vsel %vm427, %v1060, %v1062
    %v1157 = vsel %vm427, %v1064, %v1066
    %v1158 = vsel %vm427, %v1066, %v1068
    %v1159 = vsel %vm427, %v1068, %v1070
    %v1160 = vsel %vm427, %v1070, %v1072
    %v1161 = vsel %vm427, %v1072, %v1074
    %v1162 = vsel %vm427, %v1074, %v1076
    %v1163 = vsel %vm427, %v1078, %v1080
    %v1164 = vsel %vm427, %v1080, %v1082
    %v1165 = vsel %vm427, %v1082, %v1084
    %v1166 = vsel %vm427, %v1084, %v1086
    %v1167 = vsel %vm427, %v1086, %v1088
    %v1168 = vsel %vm427, %v1088, %v1090
    %v1169 = vsel %vm427, %v1092, %v1094
    %v1170 = vsel %vm427, %v1094, %v1096
    %v1171 = vsel %vm427, %v1096, %v1098
    %v1172 = vsel %vm427, %v1098, %v1100
    %v1173 = vsel %vm427, %v1100, %v1102
    %v1174 = vsel %vm427, %v1102, %v1104
    %v1175 = vsel %vm427, %v1106, %v1108
    %v1176 = vsel %vm427, %v1108, %v1110
    %v1177 = vsel %vm427, %v1110, %v1112
    %v1178 = vsel %vm427, %v1112, %v1114
    %v1179 = vsel %vm427, %v1114, %v1116
    %v1180 = vsel %vm427, %v1116, %v1118
    %v1181 = vsel %vm427, %v1120, %v1122
    %v1182 = vsel %vm427, %v1122, %v1124
    %v1183 = vsel %vm427, %v1124, %v1126
    %v1184 = vsel %vm427, %v1126, %v1128
    %v1185 = vsel %vm427, %v1128, %v1130
    %v1186 = vsel %vm427, %v1130, %v1132
    %vm1241 = vcmask 588800
    %v1243 = vsel %vm1241, %v1006, 0
    %1245 = vmatprep.subr.mxu0 %v1134
    %1246 = vmatpush1.msra.mxu0 %v1133
    %1247 = vmatprep.subr.mxu0 %v1140
    %1248 = vmatpush1.msra.mxu0 %v1139
    %1249 = vmatprep.subr.mxu0 %v1146
    %1250 = vmatpush1.msra.mxu0 %v1145
    %1251 = vmatprep.subr.mxu0 %v1152
    %1252 = vmatpush1.msra.mxu0 %v1151
    %1253 = vmatprep.subr.mxu0 %v1158
    %1254 = vmatpush1.msra.mxu0 %v1157
    %1255 = vmatprep.subr.mxu0 %v1164
    %1256 = vmatpush1.msra.mxu0 %v1163
    %1257 = vmatprep.subr.mxu0 %v1170
    %1258 = vmatpush1.msra.mxu0 %v1169
    %1259 = vmatprep.subr.mxu0 %v1176
    %1260 = vmatpush1.msra.mxu0 %v1175
    %1261 = vmatprep.subr.mxu0 %v1182
    %1262 = vmatpush1.msra.mxu0 %v1181
    %1263 = vmatprep.subr.mxu0 0.0
    %1264 = vmatpush1.msra.mxu0 0.0
    %1265 = vmatprep.subr.mxu0 0.0
    %1266 = vmatpush1.msra.mxu0 0.0
    %1267 = vmatprep.subr.mxu0 0.0
    %1268 = vmatpush1.msra.mxu0 0.0
    %1269 = vmatprep.subr.mxu0 0.0
    %1270 = vmatpush1.msra.mxu0 0.0
    %1271 = vmatprep.subr.mxu0 0.0
    %1272 = vmatpush1.msra.mxu0 0.0
    %1273 = vmatprep.subr.mxu0 0.0
    %1274 = vmatpush1.msra.mxu0 0.0
    %1275 = vmatprep.subr.mxu0 0.0
    %1276 = vmatpush1.msra.mxu0 0.0
    %1277 = vmatprep.subr.mxu0 0.0
    %1278 = vmatpush1.msra.mxu0 0.0
    %1279 = vmatprep.subr.mxu0 0.0
    %1280 = vmatpush1.msra.mxu0 0.0
    %1281 = vmatprep.subr.mxu0 0.0
    %1282 = vmatpush1.msra.mxu0 0.0
    %1283 = vmatprep.subr.mxu0 0.0
    %1284 = vmatpush1.msra.mxu0 0.0
    %1285 = vmatprep.subr.mxu0 0.0
    %1286 = vmatpush1.msra.mxu0 0.0
    %1287 = vmatprep.subr.mxu0 0.0
    %1288 = vmatpush1.msra.mxu0 0.0
    %1289 = vmatprep.subr.mxu0 0.0
    %1290 = vmatpush1.msra.mxu0 0.0
    %1291 = vmatprep.subr.mxu0 0.0
    %1292 = vmatpush1.msra.mxu0 0.0
    %1293 = vmatprep.subr.mxu0 0.0
    %1294 = vmatpush1.msra.mxu0 0.0
    %1295 = vmatprep.subr.mxu0 0.0
    %1296 = vmatpush1.msra.mxu0 0.0
    %1297 = vmatprep.subr.mxu0 0.0
    %1298 = vmatpush1.msra.mxu0 0.0
    %1299 = vmatprep.subr.mxu0 0.0
    %1300 = vmatpush1.msra.mxu0 0.0
    %1301 = vmatprep.subr.mxu0 0.0
    %1302 = vmatpush1.msra.mxu0 0.0
    %1303 = vmatprep.subr.mxu0 0.0
    %1304 = vmatpush1.msra.mxu0 0.0
    %1305 = vmatprep.subr.mxu0 0.0
    %1306 = vmatpush1.msra.mxu0 0.0
    %1307 = vmatprep.subr.mxu0 0.0
    %1308 = vmatpush1.msra.mxu0 0.0
    %1309 = vmatprep.mubr.f32.mxu0 0.0
    %1310 = vmatmul.mubr.f32.gmra.mrb[0].mxu0 %v1243
    %v1311 = vpop.f32.mrb[0].mxu0
    %v1312 = vadd.f32 0.0, %v1311
    %v1313 = vpop.f32.mrb[0].mxu0
    %v1314 = vadd.f32 0.0, %v1313
    %1315 = vdwg.mxu0
    %1316 = vmatprep.subr.mxu0 %v1136
    %1317 = vmatpush1.msra.mxu0 %v1135
    %1318 = vmatprep.subr.mxu0 %v1142
    %1319 = vmatpush1.msra.mxu0 %v1141
    %1320 = vmatprep.subr.mxu0 %v1148
    %1321 = vmatpush1.msra.mxu0 %v1147
    %1322 = vmatprep.subr.mxu0 %v1154
    %1323 = vmatpush1.msra.mxu0 %v1153
    %1324 = vmatprep.subr.mxu0 %v1160
    %1325 = vmatpush1.msra.mxu0 %v1159
    %1326 = vmatprep.subr.mxu0 %v1166
    %1327 = vmatpush1.msra.mxu0 %v1165
    %1328 = vmatprep.subr.mxu0 %v1172
    %1329 = vmatpush1.msra.mxu0 %v1171
    %1330 = vmatprep.subr.mxu0 %v1178
    %1331 = vmatpush1.msra.mxu0 %v1177
    %1332 = vmatprep.subr.mxu0 %v1184
    %1333 = vmatpush1.msra.mxu0 %v1183
    %1334 = vmatprep.subr.mxu0 0.0
    %1335 = vmatpush1.msra.mxu0 0.0
    %1336 = vmatprep.subr.mxu0 0.0
    %1337 = vmatpush1.msra.mxu0 0.0
    %1338 = vmatprep.subr.mxu0 0.0
    %1339 = vmatpush1.msra.mxu0 0.0
    %1340 = vmatprep.subr.mxu0 0.0
    %1341 = vmatpush1.msra.mxu0 0.0
    %1342 = vmatprep.subr.mxu0 0.0
    %1343 = vmatpush1.msra.mxu0 0.0
    %1344 = vmatprep.subr.mxu0 0.0
    %1345 = vmatpush1.msra.mxu0 0.0
    %1346 = vmatprep.subr.mxu0 0.0
    %1347 = vmatpush1.msra.mxu0 0.0
    %1348 = vmatprep.subr.mxu0 0.0
    %1349 = vmatpush1.msra.mxu0 0.0
    %1350 = vmatprep.subr.mxu0 0.0
    %1351 = vmatpush1.msra.mxu0 0.0
    %1352 = vmatprep.subr.mxu0 0.0
    %1353 = vmatpush1.msra.mxu0 0.0
    %1354 = vmatprep.subr.mxu0 0.0
    %1355 = vmatpush1.msra.mxu0 0.0
    %1356 = vmatprep.subr.mxu0 0.0
    %1357 = vmatpush1.msra.mxu0 0.0
    %1358 = vmatprep.subr.mxu0 0.0
    %1359 = vmatpush1.msra.mxu0 0.0
    %1360 = vmatprep.subr.mxu0 0.0
    %1361 = vmatpush1.msra.mxu0 0.0
    %1362 = vmatprep.subr.mxu0 0.0
    %1363 = vmatpush1.msra.mxu0 0.0
    %1364 = vmatprep.subr.mxu0 0.0
    %1365 = vmatpush1.msra.mxu0 0.0
    %1366 = vmatprep.subr.mxu0 0.0
    %1367 = vmatpush1.msra.mxu0 0.0
    %1368 = vmatprep.subr.mxu0 0.0
    %1369 = vmatpush1.msra.mxu0 0.0
    %1370 = vmatprep.subr.mxu0 0.0
    %1371 = vmatpush1.msra.mxu0 0.0
    %1372 = vmatprep.subr.mxu0 0.0
    %1373 = vmatpush1.msra.mxu0 0.0
    %1374 = vmatprep.subr.mxu0 0.0
    %1375 = vmatpush1.msra.mxu0 0.0
    %1376 = vmatprep.subr.mxu0 0.0
    %1377 = vmatpush1.msra.mxu0 0.0
    %1378 = vmatprep.subr.mxu0 0.0
    %1379 = vmatpush1.msra.mxu0 0.0
    %1380 = vmatprep.mubr.f32.mxu0 0.0
    %1381 = vmatmul.mubr.f32.gmra.mrb[0].mxu0 %v1243
    %v1382 = vpop.f32.mrb[0].mxu0
    %v1383 = vadd.f32 0.0, %v1382
    %v1384 = vpop.f32.mrb[0].mxu0
    %v1385 = vadd.f32 0.0, %v1384
    %1386 = vdwg.mxu0
    %1387 = vmatprep.subr.mxu0 %v1138
    %1388 = vmatpush1.msra.mxu0 %v1137
    %1389 = vmatprep.subr.mxu0 %v1144
    %1390 = vmatpush1.msra.mxu0 %v1143
    %1391 = vmatprep.subr.mxu0 %v1150
    %1392 = vmatpush1.msra.mxu0 %v1149
    %1393 = vmatprep.subr.mxu0 %v1156
    %1394 = vmatpush1.msra.mxu0 %v1155
    %1395 = vmatprep.subr.mxu0 %v1162
    %1396 = vmatpush1.msra.mxu0 %v1161
    %1397 = vmatprep.subr.mxu0 %v1168
    %1398 = vmatpush1.msra.mxu0 %v1167
    %1399 = vmatprep.subr.mxu0 %v1174
    %1400 = vmatpush1.msra.mxu0 %v1173
    %1401 = vmatprep.subr.mxu0 %v1180
    %1402 = vmatpush1.msra.mxu0 %v1179
    %1403 = vmatprep.subr.mxu0 %v1186
    %1404 = vmatpush1.msra.mxu0 %v1185
    %1405 = vmatprep.subr.mxu0 0.0
    %1406 = vmatpush1.msra.mxu0 0.0
    %1407 = vmatprep.subr.mxu0 0.0
    %1408 = vmatpush1.msra.mxu0 0.0
    %1409 = vmatprep.subr.mxu0 0.0
    %1410 = vmatpush1.msra.mxu0 0.0
    %1411 = vmatprep.subr.mxu0 0.0
    %1412 = vmatpush1.msra.mxu0 0.0
    %1413 = vmatprep.subr.mxu0 0.0
    %1414 = vmatpush1.msra.mxu0 0.0
    %1415 = vmatprep.subr.mxu0 0.0
    %1416 = vmatpush1.msra.mxu0 0.0
    %1417 = vmatprep.subr.mxu0 0.0
    %1418 = vmatpush1.msra.mxu0 0.0
    %1419 = vmatprep.subr.mxu0 0.0
    %1420 = vmatpush1.msra.mxu0 0.0
    %1421 = vmatprep.subr.mxu0 0.0
    %1422 = vmatpush1.msra.mxu0 0.0
    %1423 = vmatprep.subr.mxu0 0.0
    %1424 = vmatpush1.msra.mxu0 0.0
    %1425 = vmatprep.subr.mxu0 0.0
    %1426 = vmatpush1.msra.mxu0 0.0
    %1427 = vmatprep.subr.mxu0 0.0
    %1428 = vmatpush1.msra.mxu0 0.0
    %1429 = vmatprep.subr.mxu0 0.0
    %1430 = vmatpush1.msra.mxu0 0.0
    %1431 = vmatprep.subr.mxu0 0.0
    %1432 = vmatpush1.msra.mxu0 0.0
    %1433 = vmatprep.subr.mxu0 0.0
    %1434 = vmatpush1.msra.mxu0 0.0
    %1435 = vmatprep.subr.mxu0 0.0
    %1436 = vmatpush1.msra.mxu0 0.0
    %1437 = vmatprep.subr.mxu0 0.0
    %1438 = vmatpush1.msra.mxu0 0.0
    %1439 = vmatprep.subr.mxu0 0.0
    %1440 = vmatpush1.msra.mxu0 0.0
    %1441 = vmatprep.subr.mxu0 0.0
    %1442 = vmatpush1.msra.mxu0 0.0
    %1443 = vmatprep.subr.mxu0 0.0
    %1444 = vmatpush1.msra.mxu0 0.0
    %1445 = vmatprep.subr.mxu0 0.0
    %1446 = vmatpush1.msra.mxu0 0.0
    %1447 = vmatprep.subr.mxu0 0.0
    %1448 = vmatpush1.msra.mxu0 0.0
    %1449 = vmatprep.subr.mxu0 0.0
    %1450 = vmatpush1.msra.mxu0 0.0
    %1451 = vmatprep.mubr.f32.mxu0 0.0
    %1452 = vmatmul.mubr.f32.gmra.mrb[0].mxu0 %v1243
    %v1453 = vpop.f32.mrb[0].mxu0
    %v1454 = vadd.f32 0.0, %v1453
    %v1455 = vpop.f32.mrb[0].mxu0
    %v1456 = vadd.f32 0.0, %v1455
    %1457 = vdwg.mxu0
    %v1458 = vmul.f32 %v1312, %v715
    %v1459 = vmul.f32 %v1314, %v719
    %v1460 = vmul.f32 %v1383, %v723
    %v1461 = vmul.f32 %v1385, %v727
    %v1462 = vmul.f32 %v1454, %v731
    %v1463 = vmul.f32 %v1456, %v735
    %v1464 = vadd.f32 %v1458, %v1459
    %v1465 = vadd.f32 %v1464, %v1460
    %v1466 = vadd.f32 %v1465, %v1461
    %v1467 = vadd.f32 %v1466, %v1462
    %v1468 = vadd.f32 %v1467, %v1463
    %1469 = vadd.xlane.f32.xlu0 %v1468
    %v1470 = vpop.xlane.xlu0 %1469
    %v1471 = vmul.f32 %v1470, 0.001953125
    %v1472 = vmul.f32 %v1458, %v1312
    %v1473 = vmul.f32 %v1459, %v1314
    %v1474 = vmul.f32 %v1460, %v1383
    %v1475 = vmul.f32 %v1461, %v1385
    %v1476 = vmul.f32 %v1462, %v1454
    %v1477 = vmul.f32 %v1463, %v1456
    %v1478 = vadd.f32 %v1472, %v1473
    %v1479 = vadd.f32 %v1478, %v1474
    %v1480 = vadd.f32 %v1479, %v1475
    %v1481 = vadd.f32 %v1480, %v1476
    %v1482 = vadd.f32 %v1481, %v1477
    %1483 = vadd.xlane.f32.xlu0 %v1482
    %v1484 = vpop.xlane.xlu0 %1483
    %v1485 = vmul.f32 %v1484, 0.001953125
    %v1486 = vmul.f32 %v1471, %v1471
    %v1487 = vsub.f32 %v1485, %v1486
    %v1488 = vld [vmem:[%s6] sm:$0xff]
    %v1489 = vadd.f32 %v1487, 1e-05
    %v1490 = vrsqrt.pop %v1489
    %v1491 = vmul.f32 %v1488, %v1490
    %v1492 = vld [vmem:[%s7] sm:$0xff]
    %v1493 = vmul.f32 %v1471, %v1491
    %v1494 = vsub.f32 %v1492, %v1493
    %1496 = vset.pattern.permute.xlu0 0
    %1497 = vperm.xlu0 %1496, %v1491
    %v1498 = vpop.permute.xlu0 %1497
    %v1500 = vmul.f32 %v1312, %v1498
    %v1501 = vmul.f32 %v1314, %v1498
    %v1502 = vmul.f32 %v1383, %v1498
    %v1503 = vmul.f32 %v1385, %v1498
    %v1504 = vmul.f32 %v1454, %v1498
    %v1505 = vmul.f32 %v1456, %v1498
    %1507 = vset.pattern.permute.xlu0 0
    %1508 = vperm.xlu0 %1507, %v1494
    %v1509 = vpop.permute.xlu0 %1508
    %v1511 = vadd.f32 %v1500, %v1509
    %v1512 = vadd.f32 %v1501, %v1509
    %v1513 = vadd.f32 %v1502, %v1509
    %v1514 = vadd.f32 %v1503, %v1509
    %v1515 = vadd.f32 %v1504, %v1509
    %v1516 = vadd.f32 %v1505, %v1509
    %v1517 = vmax.f32 %v1511, 0.0
    %v1518 = vmax.f32 %v1512, 0.0
    %v1519 = vmax.f32 %v1513, 0.0
    %v1520 = vmax.f32 %v1514, 0.0
    %v1521 = vmax.f32 %v1515, 0.0
    %v1522 = vmax.f32 %v1516, 0.0
    %1523 = vst [vmem:[#allocation6] sm:$0xff] %v1517
    %1524 = vst [vmem:[#allocation6 + $0x8] sm:$0xff] %v1518
    %1525 = vst [vmem:[#allocation6 + $0x10] sm:$0xff] %v1519
    %1526 = vst [vmem:[#allocation6 + $0x18] sm:$0xff] %v1520
    %1527 = vst [vmem:[#allocation6 + $0x20] sm:$0xff] %v1521
    %1528 = vst [vmem:[#allocation6 + $0x28] sm:$0xff] %v1522
    // Predicated region
    $region38: #{tpu_custom_call.1} parent=1 // pred_check
      _
    $region39: #{tpu_custom_call.1} parent=1 // pred_check_branch
      %1530 = sbr.rel (0) target = $region41
    $region40: #{tpu_custom_call.1} parent=1 // pred_region
      %s1532 = ssub.s32 768, 768
      %1533 = vsyncadd [#allocation5], %s1532
      %s1535 = sshll.u32 [#allocation6], 4
      %s1536 = int_to_ptr.vmem [resolvable:$true] %s1535
      %1538 = dma.vmem_to_hbm [thread:$0]  %s1536, 768, %s8, [#allocation5]
    $region41: #{tpu_custom_call.1} parent=1 // pred_fallthru
      _
    // Predicated region
    $region42: #{tpu_custom_call.1} parent=1 // pred_check
      _
    $region43: #{tpu_custom_call.1} parent=1 // pred_check_branch
      %1540 = sbr.rel (0) target = $region45
    $region44: #{tpu_custom_call.1} parent=1 // pred_region
      %1541 = dma.done [#allocation5], 768
    $region45: #{tpu_custom_call.1} parent=1 // pred_fallthru
      _
    %1542 = vsyncpa [#allocation4], 1
    %1543 = vsyncpa [#allocation5], 1

</llo_original>
